<compile_context>
chip_gen: v6e
topology: v6e:2x2x1
jax: 0.10.0
libtpu: 0.0.40
codegen_flags: <defaults>
</compile_context>

<pallas_src>
import jax
import jax.numpy as jnp
from jax.experimental import pallas as pl
from jax.experimental.pallas import tpu as pltpu

RMS_EPS = 1e-8          # eps used by the HGRN-Bit BitLinear RMSNorm
QUANT_CLAMP_MIN = 1e-5  # absmax clamp used by activation/weight quant


def _round_up(n, m):
    return ((n + m - 1) // m) * m


def _cdiv(a, b):
    return -(-a // b)


def _default_weight_dtype():
    """int8 MXU path on v5*/v6* (~2x bf16 rate, half the weight DMA/VMEM);
    bf16 everywhere else (the v7x MXU has no integer mode)."""
    try:
        kind = jax.devices()[0].device_kind.lower()
    except Exception:
        return jnp.bfloat16
    if ("v5" in kind) or ("v6" in kind):
        return jnp.int8
    return jnp.bfloat16


def _rmsnorm_quant(x, g):
    """RMSNorm (affine weight g) -> per-row 8-bit absmax quantization.

    Returns integer-valued quantized activations (f32 values in [-128, 127],
    exact when cast to int8/bf16) and the per-row dequant scale (amax / 127).
    The dequant is NOT applied here; it is folded into a per-row multiply
    after the matmul so the MXU operands stay exact small integers.
    """
    var = jnp.mean(x * x, axis=-1, keepdims=True)
    xn = x * jax.lax.rsqrt(var + RMS_EPS) * g
    amax = jnp.maximum(jnp.max(jnp.abs(xn), axis=-1, keepdims=True),
                       QUANT_CLAMP_MIN)
    q = jnp.clip(jnp.round(xn * (127.0 / amax)), -128.0, 127.0)
    return q, amax * (1.0 / 127.0)


def _q_dot(q, w_ref):
    """Exact integer matmul; dtype of the (prequantized) weight ref selects the
    MXU mode: int8 x int8 -> int32 on v5e/v6e, bf16 x bf16 -> f32 elsewhere."""
    w = w_ref[...]
    if w.dtype == jnp.int8:
        return jnp.dot(q.astype(jnp.int8), w,
                       preferred_element_type=jnp.int32).astype(jnp.float32)
    return jnp.dot(q.astype(jnp.bfloat16), w,
                   preferred_element_type=jnp.float32)


def _hgrn_bit_mlp_kernel(x_ref, gg_ref, gd_ref, wgg_ref, wgu_ref, wd_ref,
                         wgs_ref, wds_ref, o_ref):
    """Fused BitLinear(gate/up) -> swiglu -> BitLinear(down) for one row tile."""
    x = x_ref[...].astype(jnp.float32)                        # [tm, H]

    # ---- gate_proj (BitLinear): norm + act-quant, integer MXU matmuls ----
    q, dq = _rmsnorm_quant(x, gg_ref[...])                    # [tm, H], [tm, 1]
    gate = _q_dot(q, wgg_ref) * (dq * wgs_ref[...])           # true scale needed
                                                              # (sigmoid is not
                                                              #  scale-invariant)
    # 'up' keeps only the raw integer accumulation: the positive per-row scale
    # cancels exactly through the down-BitLinear RMSNorm + absmax quant.
    up_raw = _q_dot(q, wgu_ref)                               # [tm, I]

    # ---- swiglu: silu(gate) * up ----
    s = gate * jax.nn.sigmoid(gate) * up_raw                  # [tm, I] (row-scaled)

    # ---- down_proj (BitLinear) ----
    q2, dq2 = _rmsnorm_quant(s, gd_ref[...])
    z = _q_dot(q2, wd_ref) * (dq2 * wds_ref[...])
    o_ref[...] = z.astype(o_ref.dtype)


def weight_quant_ternary(w):
    """Per-tensor ternary (1.58-bit) quant.

    Returns the integer {-1, 0, 1} matrix (int8/bf16-exact) and the scalar
    dequantization multiplier, matching BitLinear's weight_quant.
    """
    scale = 1.0 / jnp.clip(jnp.mean(jnp.abs(w)), QUANT_CLAMP_MIN, None)
    tern = jnp.clip(jnp.round(w * scale), -1.0, 1.0)
    return tern, 1.0 / scale


def prepare_hgrn_bit_mlp_params(w_gate, w_down, g_gate=None, g_down=None,
                                weight_dtype=None):
    """One-time parameter preprocessing (hoisted out of the per-step hot path).

    w_gate: [2I, H], w_down: [H, I] in nn.Linear [out, in] layout.
    Returns ternary-quantized, transposed ([in, out]) weights in the MXU
    operand dtype plus scalar dequant scales and RMSNorm affine weights.
    """
    if weight_dtype is None:
        weight_dtype = _default_weight_dtype()
    two_i, H = w_gate.shape
    assert two_i % 2 == 0
    inter = two_i // 2
    assert w_down.shape == (H, inter)

    wg_t, wg_s = weight_quant_ternary(w_gate.astype(jnp.float32))
    wd_t, wd_s = weight_quant_ternary(w_down.astype(jnp.float32))
    if g_gate is None:
        g_gate = jnp.ones((H,), jnp.float32)
    if g_down is None:
        g_down = jnp.ones((inter,), jnp.float32)

    return dict(
        wgg=wg_t[:inter].T.astype(weight_dtype),   # [H, I] gate half
        wgu=wg_t[inter:].T.astype(weight_dtype),   # [H, I] up half
        wdn=wd_t.T.astype(weight_dtype),           # [I, H]
        wgs=jnp.reshape(wg_s, (1, 1)).astype(jnp.float32),
        wds=jnp.reshape(wd_s, (1, 1)).astype(jnp.float32),
        gg=jnp.reshape(g_gate, (1, H)).astype(jnp.float32),
        gd=jnp.reshape(g_down, (1, inter)).astype(jnp.float32),
    )


def hgrn_bit_mlp(x, params, *, tm=256, single_buffer_weights=True):
    """x: [B, S, H]; params: output of prepare_hgrn_bit_mlp_params."""
    B, S, H = x.shape
    H_w, inter = params["wgg"].shape
    assert H_w == H and params["wdn"].shape == (inter, H)

    # ---- row tiling: large M tiles keep the MXU fed, but cap tm so the row
    # grid has >= 2 tiles (both v7x TensorCores get work); pad ragged T with 0
    # (zero rows quantize to 0 and are sliced off after the call). ----
    T = B * S
    tm = max(8, min(int(tm), _round_up(_cdiv(T, 2), 8)))
    T_pad = _round_up(T, tm)
    xf = x.reshape(T, H)
    if T_pad != T:
        xf = jnp.pad(xf, ((0, T_pad - T), (0, 0)))

    # ---- explicit VMEM budget: single-buffered weights + double-buffered
    # x/out tiles + live f32 intermediates, with 1.5x headroom. ----
    wbytes = jnp.dtype(params["wgg"].dtype).itemsize
    xbytes = jnp.dtype(x.dtype).itemsize
    est = (3 * H * inter * wbytes            # wgg + wgu + wdn (single-buffered)
           + 2 * 2 * tm * H * xbytes         # x + out double buffers
           + 6 * tm * inter * 4              # gate/up/s/q2 + quantizer temps
           + 6 * tm * H * 4)                 # x f32 / xn / q / z temps
    vmem_limit = int(max(32 << 20, min(int(1.5 * est) + (2 << 20), 64 << 20)))

    # Constant-index (weight/scale) inputs: single-buffer them — their
    # index_map never changes, so double-buffering only wastes VMEM.
    wkw = dict(pipeline_mode=pl.Buffered(1)) if single_buffer_weights else {}

    def const_spec(shape):
        return pl.BlockSpec(shape, lambda i: (0, 0), **wkw)

    out = pl.pallas_call(
        _hgrn_bit_mlp_kernel,
        out_shape=jax.ShapeDtypeStruct((T_pad, H), x.dtype),
        grid_spec=pltpu.PrefetchScalarGridSpec(
            num_scalar_prefetch=0,
            grid=(T_pad // tm,),
            in_specs=[
                pl.BlockSpec((tm, H), lambda i: (i, 0)),   # x row tile
                const_spec((1, H)),                        # gate-norm affine
                const_spec((1, inter)),                    # down-norm affine
                const_spec((H, inter)),                    # W_gate half
                const_spec((H, inter)),                    # W_up half
                const_spec((inter, H)),                    # W_down
                const_spec((1, 1)),                        # gate weight scale
                const_spec((1, 1)),                        # down weight scale
            ],
            out_specs=pl.BlockSpec((tm, H), lambda i: (i, 0)),
        ),
        compiler_params=pltpu.CompilerParams(
            dimension_semantics=("parallel",),
            vmem_limit_bytes=vmem_limit),
    )(xf, params["gg"], params["gd"], params["wgg"], params["wgu"],
      params["wdn"], params["wgs"], params["wds"])
    return out[:T].reshape(B, S, H)


# ----------------------------- pure-JAX reference ---------------------------
def _weight_quant_ref(w):
    scale = 1.0 / jnp.clip(jnp.mean(jnp.abs(w)), QUANT_CLAMP_MIN, None)
    return jnp.clip(jnp.round(w * scale), -1.0, 1.0) / scale


def _activation_quant_ref(x):
    scale = 127.0 / jnp.clip(jnp.max(jnp.abs(x), axis=-1, keepdims=True),
                             QUANT_CLAMP_MIN, None)
    return jnp.clip(jnp.round(x * scale), -128.0, 127.0) / scale


def _rmsnorm_ref(x, g):
    var = jnp.mean(x * x, axis=-1, keepdims=True)
    return x * jax.lax.rsqrt(var + RMS_EPS) * g


def hgrn_bit_mlp_ref(x, w_gate, w_down, g_gate=None, g_down=None):
    """Reference with the same op order as the PyTorch forward
    (dequantize first, then f32 matmul)."""
    H = x.shape[-1]
    inter = w_gate.shape[0] // 2
    if g_gate is None:
        g_gate = jnp.ones((H,), jnp.float32)
    if g_down is None:
        g_down = jnp.ones((inter,), jnp.float32)
    xq = _activation_quant_ref(_rmsnorm_ref(x.astype(jnp.float32), g_gate))
    y = xq @ _weight_quant_ref(w_gate.astype(jnp.float32)).T
    gate, up = y[..., :inter], y[..., inter:]
    s = gate * jax.nn.sigmoid(gate) * up
    sq = _activation_quant_ref(_rmsnorm_ref(s, g_down))
    return (sq @ _weight_quant_ref(w_down.astype(jnp.float32)).T).astype(x.dtype)


if __name__ == "__main__":
    # Module config (HGRNBitMLP.__init__ with hidden_ratio=4):
    hidden_size = 128
    hidden_ratio = 4
    intermediate_size = int(hidden_size * hidden_ratio * 2 / 3)
    intermediate_size = 256 * ((intermediate_size + 256 - 1) // 256)   # -> 512
    batch, seq = 2, 8

    key = jax.random.PRNGKey(0)
    kx, kg, kd = jax.random.split(key, 3)
    x = jax.random.normal(kx, (batch, seq, hidden_size), dtype=jnp.float32)
    # nn.Linear layout: [out_features, in_features]
    w_gate = jax.random.normal(
        kg, (2 * intermediate_size, hidden_size), dtype=jnp.float32) * 0.02
    w_down = jax.random.normal(
        kd, (hidden_size, intermediate_size), dtype=jnp.float32) * 0.02
    g_gate = jnp.ones((hidden_size,), jnp.float32)        # RMSNorm affine weights
    g_down = jnp.ones((intermediate_size,), jnp.float32)

    # Weight preprocessing is done ONCE here (hoisted out of the hot path);
    # the steady-state per-step cost is just the fused Pallas kernel.
    try:
        params = prepare_hgrn_bit_mlp_params(w_gate, w_down, g_gate, g_down)
        z = jax.block_until_ready(hgrn_bit_mlp(x, params))
    except Exception:
        # Conservative fallback: portable bf16 MXU path, default buffering
        # (covers chips where the int8 MXU mode / single-buffering hint is
        # unavailable).
        params = prepare_hgrn_bit_mlp_params(w_gate, w_down, g_gate, g_down,
                                             weight_dtype=jnp.bfloat16)
        z = jax.block_until_ready(
            hgrn_bit_mlp(x, params, single_buffer_weights=False))

    assert z.shape == (batch, seq, hidden_size)
    assert bool(jnp.all(jnp.isfinite(z)))

    z_ref = hgrn_bit_mlp_ref(x, w_gate, w_down, g_gate, g_down)
    # Tolerance note: the kernel applies dequant scales AFTER the exact-integer
    # matmuls and drops the per-row scale on the 'up' branch (it cancels
    # through the down-BitLinear's scale-invariant RMSNorm + absmax quant, up
    # to RMS_EPS); versus the reference's dequantize-then-f32-matmul order an
    # occasional 8-bit round() can land on the other side of a .5 boundary,
    # each flip moving an output element by about amax/127 * mean|W| ~ 5e-4.
    max_err = float(jnp.max(jnp.abs(z - z_ref)))
    mean_err = float(jnp.mean(jnp.abs(z - z_ref)))
    assert max_err < 5e-3, f"max_err={max_err}"
    assert mean_err < 5e-4, f"mean_err={mean_err}"

    print("KERNEL_OK")
</pallas_src>

<mosaic_0001>
module attributes {stable_mosaic.version = 11 : i64} {
  func.func @_hgrn_bit_mlp_kernel(%arg0: i32, %arg1: memref<8x128xf32, #tpu.memory_space<vmem>>, %arg2: memref<1x128xf32, #tpu.memory_space<vmem>>, %arg3: memref<1x512xf32, #tpu.memory_space<vmem>>, %arg4: memref<128x512xbf16, #tpu.memory_space<vmem>>, %arg5: memref<128x512xbf16, #tpu.memory_space<vmem>>, %arg6: memref<512x128xbf16, #tpu.memory_space<vmem>>, %arg7: memref<1x1xf32, #tpu.memory_space<vmem>>, %arg8: memref<1x1xf32, #tpu.memory_space<vmem>>, %arg9: memref<8x128xf32, #tpu.memory_space<vmem>>) attributes {dimension_semantics = [#tpu.dimension_semantics<parallel>], iteration_bounds = array<i64: 2>, scalar_prefetch = 0 : i64, scratch_operands = 0 : i64, tpu.core_type = #tpu.core_type<tc>, window_params = [{transform_indices = @transform_0, window_bounds = array<i64: 8, 128>}, {pipeline_mode = #tpu.pipeline_mode<synchronous>, transform_indices = @transform_1, window_bounds = array<i64: 1, 128>}, {pipeline_mode = #tpu.pipeline_mode<synchronous>, transform_indices = @transform_2, window_bounds = array<i64: 1, 512>}, {pipeline_mode = #tpu.pipeline_mode<synchronous>, transform_indices = @transform_3, window_bounds = array<i64: 128, 512>}, {pipeline_mode = #tpu.pipeline_mode<synchronous>, transform_indices = @transform_4, window_bounds = array<i64: 128, 512>}, {pipeline_mode = #tpu.pipeline_mode<synchronous>, transform_indices = @transform_5, window_bounds = array<i64: 512, 128>}, {pipeline_mode = #tpu.pipeline_mode<synchronous>, transform_indices = @transform_6, window_bounds = array<i64: 1, 1>}, {pipeline_mode = #tpu.pipeline_mode<synchronous>, transform_indices = @transform_7, window_bounds = array<i64: 1, 1>}, {transform_indices = @transform_8, window_bounds = array<i64: 8, 128>}]} {
    %c0 = arith.constant 0 : index
    %c0_0 = arith.constant 0 : index
    %0 = vector.load %arg1[%c0, %c0_0] : memref<8x128xf32, #tpu.memory_space<vmem>>, vector<8x128xf32>
    %c0_1 = arith.constant 0 : index
    %c0_2 = arith.constant 0 : index
    %1 = vector.load %arg2[%c0_1, %c0_2] : memref<1x128xf32, #tpu.memory_space<vmem>>, vector<1x128xf32>
    %2 = arith.mulf %0, %0 : vector<8x128xf32>
    %cst = arith.constant dense<0.000000e+00> : vector<8xf32>
    %3 = vector.multi_reduction <add>, %2, %cst [1] : vector<8x128xf32> to vector<8xf32>
    %4 = vector.shape_cast %3 : vector<8xf32> to vector<8x1xf32>
    %cst_3 = arith.constant 1.280000e+02 : f32
    %5 = vector.broadcast %cst_3 : f32 to vector<8x1xf32>
    %6 = arith.divf %4, %5 : vector<8x1xf32>
    %cst_4 = arith.constant 9.99999993E-9 : f32
    %7 = vector.broadcast %cst_4 : f32 to vector<8x1xf32>
    %8 = arith.addf %6, %7 : vector<8x1xf32>
    %9 = math.rsqrt %8 : vector<8x1xf32>
    %10 = vector.broadcast %9 : vector<8x1xf32> to vector<8x128xf32>
    %11 = arith.mulf %0, %10 : vector<8x128xf32>
    %12 = vector.broadcast %1 : vector<1x128xf32> to vector<8x128xf32>
    %13 = arith.mulf %11, %12 : vector<8x128xf32>
    %14 = math.absf %13 : vector<8x128xf32>
    %cst_5 = arith.constant dense<0xFF800000> : vector<8xf32>
    %15 = vector.multi_reduction <maximumf>, %14, %cst_5 [1] : vector<8x128xf32> to vector<8xf32>
    %16 = vector.shape_cast %15 : vector<8xf32> to vector<8x1xf32>
    %cst_6 = arith.constant 9.99999974E-6 : f32
    %17 = vector.broadcast %cst_6 : f32 to vector<8x1xf32>
    %18 = arith.maximumf %16, %17 : vector<8x1xf32>
    %cst_7 = arith.constant 1.270000e+02 : f32
    %19 = vector.broadcast %cst_7 : f32 to vector<8x1xf32>
    %20 = arith.divf %19, %18 : vector<8x1xf32>
    %21 = vector.broadcast %20 : vector<8x1xf32> to vector<8x128xf32>
    %22 = arith.mulf %13, %21 : vector<8x128xf32>
    %23 = math.roundeven %22 : vector<8x128xf32>
    %cst_8 = arith.constant -1.280000e+02 : f32
    %cst_9 = arith.constant 1.270000e+02 : f32
    %24 = vector.broadcast %cst_8 : f32 to vector<8x128xf32>
    %25 = arith.maximumf %24, %23 : vector<8x128xf32>
    %26 = vector.broadcast %cst_9 : f32 to vector<8x128xf32>
    %27 = arith.minimumf %26, %25 : vector<8x128xf32>
    %cst_10 = arith.constant 0.00787401571 : f32
    %28 = vector.broadcast %cst_10 : f32 to vector<8x1xf32>
    %29 = arith.mulf %18, %28 : vector<8x1xf32>
    %c0_11 = arith.constant 0 : index
    %c0_12 = arith.constant 0 : index
    %30 = vector.load %arg4[%c0_11, %c0_12] : memref<128x512xbf16, #tpu.memory_space<vmem>>, vector<128x512xbf16>
    %31 = arith.truncf %27 : vector<8x128xf32> to vector<8x128xbf16>
    %cst_13 = arith.constant dense<0.000000e+00> : vector<8x512xf32>
    %32 = tpu.matmul %31, %30, %cst_13 {dimension_numbers = #tpu.dot_dimension_numbers<[1], [0], [0], [1], [0, 0, 1, 1], [], []>} : vector<8x128xbf16>, vector<128x512xbf16>, vector<8x512xf32> -> vector<8x512xf32>
    %c0_14 = arith.constant 0 : index
    %c0_15 = arith.constant 0 : index
    %33 = vector.load %arg7[%c0_14, %c0_15] : memref<1x1xf32, #tpu.memory_space<vmem>>, vector<1x1xf32>
    %34 = vector.broadcast %33 : vector<1x1xf32> to vector<8x1xf32>
    %35 = arith.mulf %29, %34 : vector<8x1xf32>
    %36 = vector.broadcast %35 : vector<8x1xf32> to vector<8x512xf32>
    %37 = arith.mulf %32, %36 : vector<8x512xf32>
    %c0_16 = arith.constant 0 : index
    %c0_17 = arith.constant 0 : index
    %38 = vector.load %arg5[%c0_16, %c0_17] : memref<128x512xbf16, #tpu.memory_space<vmem>>, vector<128x512xbf16>
    %39 = arith.truncf %27 : vector<8x128xf32> to vector<8x128xbf16>
    %cst_18 = arith.constant dense<0.000000e+00> : vector<8x512xf32>
    %40 = tpu.matmul %39, %38, %cst_18 {dimension_numbers = #tpu.dot_dimension_numbers<[1], [0], [0], [1], [0, 0, 1, 1], [], []>} : vector<8x128xbf16>, vector<128x512xbf16>, vector<8x512xf32> -> vector<8x512xf32>
    %41 = arith.negf %37 : vector<8x512xf32>
    %42 = math.exp %41 : vector<8x512xf32>
    %cst_19 = arith.constant 1.000000e+00 : f32
    %43 = vector.broadcast %cst_19 : f32 to vector<8x512xf32>
    %44 = arith.addf %43, %42 : vector<8x512xf32>
    %45 = arith.divf %43, %44 : vector<8x512xf32>
    %46 = arith.mulf %37, %45 : vector<8x512xf32>
    %47 = arith.mulf %46, %40 : vector<8x512xf32>
    %c0_20 = arith.constant 0 : index
    %c0_21 = arith.constant 0 : index
    %48 = vector.load %arg3[%c0_20, %c0_21] : memref<1x512xf32, #tpu.memory_space<vmem>>, vector<1x512xf32>
    %49 = arith.mulf %47, %47 : vector<8x512xf32>
    %cst_22 = arith.constant dense<0.000000e+00> : vector<8xf32>
    %50 = vector.multi_reduction <add>, %49, %cst_22 [1] : vector<8x512xf32> to vector<8xf32>
    %51 = vector.shape_cast %50 : vector<8xf32> to vector<8x1xf32>
    %cst_23 = arith.constant 5.120000e+02 : f32
    %52 = vector.broadcast %cst_23 : f32 to vector<8x1xf32>
    %53 = arith.divf %51, %52 : vector<8x1xf32>
    %cst_24 = arith.constant 9.99999993E-9 : f32
    %54 = vector.broadcast %cst_24 : f32 to vector<8x1xf32>
    %55 = arith.addf %53, %54 : vector<8x1xf32>
    %56 = math.rsqrt %55 : vector<8x1xf32>
    %57 = vector.broadcast %56 : vector<8x1xf32> to vector<8x512xf32>
    %58 = arith.mulf %47, %57 : vector<8x512xf32>
    %59 = vector.broadcast %48 : vector<1x512xf32> to vector<8x512xf32>
    %60 = arith.mulf %58, %59 : vector<8x512xf32>
    %61 = math.absf %60 : vector<8x512xf32>
    %cst_25 = arith.constant dense<0xFF800000> : vector<8xf32>
    %62 = vector.multi_reduction <maximumf>, %61, %cst_25 [1] : vector<8x512xf32> to vector<8xf32>
    %63 = vector.shape_cast %62 : vector<8xf32> to vector<8x1xf32>
    %cst_26 = arith.constant 9.99999974E-6 : f32
    %64 = vector.broadcast %cst_26 : f32 to vector<8x1xf32>
    %65 = arith.maximumf %63, %64 : vector<8x1xf32>
    %cst_27 = arith.constant 1.270000e+02 : f32
    %66 = vector.broadcast %cst_27 : f32 to vector<8x1xf32>
    %67 = arith.divf %66, %65 : vector<8x1xf32>
    %68 = vector.broadcast %67 : vector<8x1xf32> to vector<8x512xf32>
    %69 = arith.mulf %60, %68 : vector<8x512xf32>
    %70 = math.roundeven %69 : vector<8x512xf32>
    %cst_28 = arith.constant -1.280000e+02 : f32
    %cst_29 = arith.constant 1.270000e+02 : f32
    %71 = vector.broadcast %cst_28 : f32 to vector<8x512xf32>
    %72 = arith.maximumf %71, %70 : vector<8x512xf32>
    %73 = vector.broadcast %cst_29 : f32 to vector<8x512xf32>
    %74 = arith.minimumf %73, %72 : vector<8x512xf32>
    %cst_30 = arith.constant 0.00787401571 : f32
    %75 = vector.broadcast %cst_30 : f32 to vector<8x1xf32>
    %76 = arith.mulf %65, %75 : vector<8x1xf32>
    %c0_31 = arith.constant 0 : index
    %c0_32 = arith.constant 0 : index
    %77 = vector.load %arg6[%c0_31, %c0_32] : memref<512x128xbf16, #tpu.memory_space<vmem>>, vector<512x128xbf16>
    %78 = arith.truncf %74 : vector<8x512xf32> to vector<8x512xbf16>
    %cst_33 = arith.constant dense<0.000000e+00> : vector<8x128xf32>
    %79 = tpu.matmul %78, %77, %cst_33 {dimension_numbers = #tpu.dot_dimension_numbers<[1], [0], [0], [1], [0, 0, 1, 1], [], []>} : vector<8x512xbf16>, vector<512x128xbf16>, vector<8x128xf32> -> vector<8x128xf32>
    %c0_34 = arith.constant 0 : index
    %c0_35 = arith.constant 0 : index
    %80 = vector.load %arg8[%c0_34, %c0_35] : memref<1x1xf32, #tpu.memory_space<vmem>>, vector<1x1xf32>
    %81 = vector.broadcast %80 : vector<1x1xf32> to vector<8x1xf32>
    %82 = arith.mulf %76, %81 : vector<8x1xf32>
    %83 = vector.broadcast %82 : vector<8x1xf32> to vector<8x128xf32>
    %84 = arith.mulf %79, %83 : vector<8x128xf32>
    %c0_36 = arith.constant 0 : index
    %c0_37 = arith.constant 0 : index
    %85 = vector.load %arg9[%c0_36, %c0_37] : memref<8x128xf32, #tpu.memory_space<vmem>>, vector<8x128xf32>
    tpu.vector_store %arg9[%c0_36, %c0_37], %84 {strides = array<i32>} : memref<8x128xf32, #tpu.memory_space<vmem>>, vector<8x128xf32>,
    return
  }
  func.func @transform_0(%arg0: i32) -> (i32, i32) {
    %c0_i32 = arith.constant 0 : i32
    %c0_i32_0 = arith.constant 0 : i32
    return %arg0, %c0_i32 : i32, i32
  }
  func.func @transform_1(%arg0: i32) -> (i32, i32) {
    %c0_i32 = arith.constant 0 : i32
    %c0_i32_0 = arith.constant 0 : i32
    %c0_i32_1 = arith.constant 0 : i32
    return %c0_i32, %c0_i32_0 : i32, i32
  }
  func.func @transform_2(%arg0: i32) -> (i32, i32) {
    %c0_i32 = arith.constant 0 : i32
    %c0_i32_0 = arith.constant 0 : i32
    %c0_i32_1 = arith.constant 0 : i32
    return %c0_i32, %c0_i32_0 : i32, i32
  }
  func.func @transform_3(%arg0: i32) -> (i32, i32) {
    %c0_i32 = arith.constant 0 : i32
    %c0_i32_0 = arith.constant 0 : i32
    %c0_i32_1 = arith.constant 0 : i32
    return %c0_i32, %c0_i32_0 : i32, i32
  }
  func.func @transform_4(%arg0: i32) -> (i32, i32) {
    %c0_i32 = arith.constant 0 : i32
    %c0_i32_0 = arith.constant 0 : i32
    %c0_i32_1 = arith.constant 0 : i32
    return %c0_i32, %c0_i32_0 : i32, i32
  }
  func.func @transform_5(%arg0: i32) -> (i32, i32) {
    %c0_i32 = arith.constant 0 : i32
    %c0_i32_0 = arith.constant 0 : i32
    %c0_i32_1 = arith.constant 0 : i32
    return %c0_i32, %c0_i32_0 : i32, i32
  }
  func.func @transform_6(%arg0: i32) -> (i32, i32) {
    %c0_i32 = arith.constant 0 : i32
    %c0_i32_0 = arith.constant 0 : i32
    %c0_i32_1 = arith.constant 0 : i32
    return %c0_i32, %c0_i32_0 : i32, i32
  }
  func.func @transform_7(%arg0: i32) -> (i32, i32) {
    %c0_i32 = arith.constant 0 : i32
    %c0_i32_0 = arith.constant 0 : i32
    %c0_i32_1 = arith.constant 0 : i32
    return %c0_i32, %c0_i32_0 : i32, i32
  }
  func.func @transform_8(%arg0: i32) -> (i32, i32) {
    %c0_i32 = arith.constant 0 : i32
    %c0_i32_0 = arith.constant 0 : i32
    return %arg0, %c0_i32 : i32, i32
  }
}

module attributes {stable_mosaic.version = 11 : i64} {
  func.func @_hgrn_bit_mlp_kernel(%arg0: i32, %arg1: memref<8x128xf32, #tpu.memory_space<vmem>>, %arg2: memref<1x128xf32, #tpu.memory_space<vmem>>, %arg3: memref<1x512xf32, #tpu.memory_space<vmem>>, %arg4: memref<128x512xbf16, #tpu.memory_space<vmem>>, %arg5: memref<128x512xbf16, #tpu.memory_space<vmem>>, %arg6: memref<512x128xbf16, #tpu.memory_space<vmem>>, %arg7: memref<1x1xf32, #tpu.memory_space<vmem>>, %arg8: memref<1x1xf32, #tpu.memory_space<vmem>>, %arg9: memref<8x128xf32, #tpu.memory_space<vmem>>) attributes {dimension_semantics = [#tpu.dimension_semantics<parallel>], iteration_bounds = array<i64: 2>, scalar_prefetch = 0 : i64, scratch_operands = 0 : i64, tpu.core_type = #tpu.core_type<tc>, window_params = [{transform_indices = @transform_0, window_bounds = array<i64: 8, 128>}, {pipeline_mode = #tpu.pipeline_mode<synchronous>, transform_indices = @transform_1, window_bounds = array<i64: 1, 128>}, {pipeline_mode = #tpu.pipeline_mode<synchronous>, transform_indices = @transform_2, window_bounds = array<i64: 1, 512>}, {pipeline_mode = #tpu.pipeline_mode<synchronous>, transform_indices = @transform_3, window_bounds = array<i64: 128, 512>}, {pipeline_mode = #tpu.pipeline_mode<synchronous>, transform_indices = @transform_4, window_bounds = array<i64: 128, 512>}, {pipeline_mode = #tpu.pipeline_mode<synchronous>, transform_indices = @transform_5, window_bounds = array<i64: 512, 128>}, {pipeline_mode = #tpu.pipeline_mode<synchronous>, transform_indices = @transform_6, window_bounds = array<i64: 1, 1>}, {pipeline_mode = #tpu.pipeline_mode<synchronous>, transform_indices = @transform_7, window_bounds = array<i64: 1, 1>}, {transform_indices = @transform_8, window_bounds = array<i64: 8, 128>}]} {
    %c0 = arith.constant 0 : index
    %c0_0 = arith.constant 0 : index
    %0 = vector.load %arg1[%c0, %c0_0] : memref<8x128xf32, #tpu.memory_space<vmem>>, vector<8x128xf32>
    %c0_1 = arith.constant 0 : index
    %c0_2 = arith.constant 0 : index
    %1 = vector.load %arg2[%c0_1, %c0_2] : memref<1x128xf32, #tpu.memory_space<vmem>>, vector<1x128xf32>
    %2 = arith.mulf %0, %0 : vector<8x128xf32>
    %cst = arith.constant dense<0.000000e+00> : vector<8xf32>
    %3 = vector.multi_reduction <add>, %2, %cst [1] : vector<8x128xf32> to vector<8xf32>
    %4 = vector.shape_cast %3 : vector<8xf32> to vector<8x1xf32>
    %cst_3 = arith.constant 1.280000e+02 : f32
    %5 = vector.broadcast %cst_3 : f32 to vector<8x1xf32>
    %6 = arith.divf %4, %5 : vector<8x1xf32>
    %cst_4 = arith.constant 9.99999993E-9 : f32
    %7 = vector.broadcast %cst_4 : f32 to vector<8x1xf32>
    %8 = arith.addf %6, %7 : vector<8x1xf32>
    %9 = math.rsqrt %8 : vector<8x1xf32>
    %10 = vector.broadcast %9 : vector<8x1xf32> to vector<8x128xf32>
    %11 = arith.mulf %0, %10 : vector<8x128xf32>
    %12 = vector.broadcast %1 : vector<1x128xf32> to vector<8x128xf32>
    %13 = arith.mulf %11, %12 : vector<8x128xf32>
    %14 = math.absf %13 : vector<8x128xf32>
    %cst_5 = arith.constant dense<0xFF800000> : vector<8xf32>
    %15 = vector.multi_reduction <maximumf>, %14, %cst_5 [1] : vector<8x128xf32> to vector<8xf32>
    %16 = vector.shape_cast %15 : vector<8xf32> to vector<8x1xf32>
    %cst_6 = arith.constant 9.99999974E-6 : f32
    %17 = vector.broadcast %cst_6 : f32 to vector<8x1xf32>
    %18 = arith.maximumf %16, %17 : vector<8x1xf32>
    %cst_7 = arith.constant 1.270000e+02 : f32
    %19 = vector.broadcast %cst_7 : f32 to vector<8x1xf32>
    %20 = arith.divf %19, %18 : vector<8x1xf32>
    %21 = vector.broadcast %20 : vector<8x1xf32> to vector<8x128xf32>
    %22 = arith.mulf %13, %21 : vector<8x128xf32>
    %23 = math.roundeven %22 : vector<8x128xf32>
    %cst_8 = arith.constant -1.280000e+02 : f32
    %cst_9 = arith.constant 1.270000e+02 : f32
    %24 = vector.broadcast %cst_8 : f32 to vector<8x128xf32>
    %25 = arith.maximumf %24, %23 : vector<8x128xf32>
    %26 = vector.broadcast %cst_9 : f32 to vector<8x128xf32>
    %27 = arith.minimumf %26, %25 : vector<8x128xf32>
    %cst_10 = arith.constant 0.00787401571 : f32
    %28 = vector.broadcast %cst_10 : f32 to vector<8x1xf32>
    %29 = arith.mulf %18, %28 : vector<8x1xf32>
    %c0_11 = arith.constant 0 : index
    %c0_12 = arith.constant 0 : index
    %30 = vector.load %arg4[%c0_11, %c0_12] : memref<128x512xbf16, #tpu.memory_space<vmem>>, vector<128x512xbf16>
    %31 = arith.truncf %27 : vector<8x128xf32> to vector<8x128xbf16>
    %cst_13 = arith.constant dense<0.000000e+00> : vector<8x512xf32>
    %32 = tpu.matmul %31, %30, %cst_13 {dimension_numbers = #tpu.dot_dimension_numbers<[1], [0], [0], [1], [0, 0, 1, 1], [], []>} : vector<8x128xbf16>, vector<128x512xbf16>, vector<8x512xf32> -> vector<8x512xf32>
    %c0_14 = arith.constant 0 : index
    %c0_15 = arith.constant 0 : index
    %33 = vector.load %arg7[%c0_14, %c0_15] : memref<1x1xf32, #tpu.memory_space<vmem>>, vector<1x1xf32>
    %34 = vector.broadcast %33 : vector<1x1xf32> to vector<8x1xf32>
    %35 = arith.mulf %29, %34 : vector<8x1xf32>
    %36 = vector.broadcast %35 : vector<8x1xf32> to vector<8x512xf32>
    %37 = arith.mulf %32, %36 : vector<8x512xf32>
    %c0_16 = arith.constant 0 : index
    %c0_17 = arith.constant 0 : index
    %38 = vector.load %arg5[%c0_16, %c0_17] : memref<128x512xbf16, #tpu.memory_space<vmem>>, vector<128x512xbf16>
    %39 = arith.truncf %27 : vector<8x128xf32> to vector<8x128xbf16>
    %cst_18 = arith.constant dense<0.000000e+00> : vector<8x512xf32>
    %40 = tpu.matmul %39, %38, %cst_18 {dimension_numbers = #tpu.dot_dimension_numbers<[1], [0], [0], [1], [0, 0, 1, 1], [], []>} : vector<8x128xbf16>, vector<128x512xbf16>, vector<8x512xf32> -> vector<8x512xf32>
    %41 = arith.negf %37 : vector<8x512xf32>
    %42 = math.exp %41 : vector<8x512xf32>
    %cst_19 = arith.constant 1.000000e+00 : f32
    %43 = vector.broadcast %cst_19 : f32 to vector<8x512xf32>
    %44 = arith.addf %43, %42 : vector<8x512xf32>
    %45 = arith.divf %43, %44 : vector<8x512xf32>
    %46 = arith.mulf %37, %45 : vector<8x512xf32>
    %47 = arith.mulf %46, %40 : vector<8x512xf32>
    %c0_20 = arith.constant 0 : index
    %c0_21 = arith.constant 0 : index
    %48 = vector.load %arg3[%c0_20, %c0_21] : memref<1x512xf32, #tpu.memory_space<vmem>>, vector<1x512xf32>
    %49 = arith.mulf %47, %47 : vector<8x512xf32>
    %cst_22 = arith.constant dense<0.000000e+00> : vector<8xf32>
    %50 = vector.multi_reduction <add>, %49, %cst_22 [1] : vector<8x512xf32> to vector<8xf32>
    %51 = vector.shape_cast %50 : vector<8xf32> to vector<8x1xf32>
    %cst_23 = arith.constant 5.120000e+02 : f32
    %52 = vector.broadcast %cst_23 : f32 to vector<8x1xf32>
    %53 = arith.divf %51, %52 : vector<8x1xf32>
    %cst_24 = arith.constant 9.99999993E-9 : f32
    %54 = vector.broadcast %cst_24 : f32 to vector<8x1xf32>
    %55 = arith.addf %53, %54 : vector<8x1xf32>
    %56 = math.rsqrt %55 : vector<8x1xf32>
    %57 = vector.broadcast %56 : vector<8x1xf32> to vector<8x512xf32>
    %58 = arith.mulf %47, %57 : vector<8x512xf32>
    %59 = vector.broadcast %48 : vector<1x512xf32> to vector<8x512xf32>
    %60 = arith.mulf %58, %59 : vector<8x512xf32>
    %61 = math.absf %60 : vector<8x512xf32>
    %cst_25 = arith.constant dense<0xFF800000> : vector<8xf32>
    %62 = vector.multi_reduction <maximumf>, %61, %cst_25 [1] : vector<8x512xf32> to vector<8xf32>
    %63 = vector.shape_cast %62 : vector<8xf32> to vector<8x1xf32>
    %cst_26 = arith.constant 9.99999974E-6 : f32
    %64 = vector.broadcast %cst_26 : f32 to vector<8x1xf32>
    %65 = arith.maximumf %63, %64 : vector<8x1xf32>
    %cst_27 = arith.constant 1.270000e+02 : f32
    %66 = vector.broadcast %cst_27 : f32 to vector<8x1xf32>
    %67 = arith.divf %66, %65 : vector<8x1xf32>
    %68 = vector.broadcast %67 : vector<8x1xf32> to vector<8x512xf32>
    %69 = arith.mulf %60, %68 : vector<8x512xf32>
    %70 = math.roundeven %69 : vector<8x512xf32>
    %cst_28 = arith.constant -1.280000e+02 : f32
    %cst_29 = arith.constant 1.270000e+02 : f32
    %71 = vector.broadcast %cst_28 : f32 to vector<8x512xf32>
    %72 = arith.maximumf %71, %70 : vector<8x512xf32>
    %73 = vector.broadcast %cst_29 : f32 to vector<8x512xf32>
    %74 = arith.minimumf %73, %72 : vector<8x512xf32>
    %cst_30 = arith.constant 0.00787401571 : f32
    %75 = vector.broadcast %cst_30 : f32 to vector<8x1xf32>
    %76 = arith.mulf %65, %75 : vector<8x1xf32>
    %c0_31 = arith.constant 0 : index
    %c0_32 = arith.constant 0 : index
    %77 = vector.load %arg6[%c0_31, %c0_32] : memref<512x128xbf16, #tpu.memory_space<vmem>>, vector<512x128xbf16>
    %78 = arith.truncf %74 : vector<8x512xf32> to vector<8x512xbf16>
    %cst_33 = arith.constant dense<0.000000e+00> : vector<8x128xf32>
    %79 = tpu.matmul %78, %77, %cst_33 {dimension_numbers = #tpu.dot_dimension_numbers<[1], [0], [0], [1], [0, 0, 1, 1], [], []>} : vector<8x512xbf16>, vector<512x128xbf16>, vector<8x128xf32> -> vector<8x128xf32>
    %c0_34 = arith.constant 0 : index
    %c0_35 = arith.constant 0 : index
    %80 = vector.load %arg8[%c0_34, %c0_35] : memref<1x1xf32, #tpu.memory_space<vmem>>, vector<1x1xf32>
    %81 = vector.broadcast %80 : vector<1x1xf32> to vector<8x1xf32>
    %82 = arith.mulf %76, %81 : vector<8x1xf32>
    %83 = vector.broadcast %82 : vector<8x1xf32> to vector<8x128xf32>
    %84 = arith.mulf %79, %83 : vector<8x128xf32>
    %c0_36 = arith.constant 0 : index
    %c0_37 = arith.constant 0 : index
    %85 = vector.load %arg9[%c0_36, %c0_37] : memref<8x128xf32, #tpu.memory_space<vmem>>, vector<8x128xf32>
    tpu.vector_store %arg9[%c0_36, %c0_37], %84 {strides = array<i32>} : memref<8x128xf32, #tpu.memory_space<vmem>>, vector<8x128xf32>,
    return
  }
  func.func @transform_0(%arg0: i32) -> (i32, i32) {
    %c0_i32 = arith.constant 0 : i32
    %c0_i32_0 = arith.constant 0 : i32
    return %arg0, %c0_i32 : i32, i32
  }
  func.func @transform_1(%arg0: i32) -> (i32, i32) {
    %c0_i32 = arith.constant 0 : i32
    %c0_i32_0 = arith.constant 0 : i32
    %c0_i32_1 = arith.constant 0 : i32
    return %c0_i32, %c0_i32_0 : i32, i32
  }
  func.func @transform_2(%arg0: i32) -> (i32, i32) {
    %c0_i32 = arith.constant 0 : i32
    %c0_i32_0 = arith.constant 0 : i32
    %c0_i32_1 = arith.constant 0 : i32
    return %c0_i32, %c0_i32_0 : i32, i32
  }
  func.func @transform_3(%arg0: i32) -> (i32, i32) {
    %c0_i32 = arith.constant 0 : i32
    %c0_i32_0 = arith.constant 0 : i32
    %c0_i32_1 = arith.constant 0 : i32
    return %c0_i32, %c0_i32_0 : i32, i32
  }
  func.func @transform_4(%arg0: i32) -> (i32, i32) {
    %c0_i32 = arith.constant 0 : i32
    %c0_i32_0 = arith.constant 0 : i32
    %c0_i32_1 = arith.constant 0 : i32
    return %c0_i32, %c0_i32_0 : i32, i32
  }
  func.func @transform_5(%arg0: i32) -> (i32, i32) {
    %c0_i32 = arith.constant 0 : i32
    %c0_i32_0 = arith.constant 0 : i32
    %c0_i32_1 = arith.constant 0 : i32
    return %c0_i32, %c0_i32_0 : i32, i32
  }
  func.func @transform_6(%arg0: i32) -> (i32, i32) {
    %c0_i32 = arith.constant 0 : i32
    %c0_i32_0 = arith.constant 0 : i32
    %c0_i32_1 = arith.constant 0 : i32
    return %c0_i32, %c0_i32_0 : i32, i32
  }
  func.func @transform_7(%arg0: i32) -> (i32, i32) {
    %c0_i32 = arith.constant 0 : i32
    %c0_i32_0 = arith.constant 0 : i32
    %c0_i32_1 = arith.constant 0 : i32
    return %c0_i32, %c0_i32_0 : i32, i32
  }
  func.func @transform_8(%arg0: i32) -> (i32, i32) {
    %c0_i32 = arith.constant 0 : i32
    %c0_i32_0 = arith.constant 0 : i32
    return %arg0, %c0_i32 : i32, i32
  }
}

</mosaic_0001>

<llo_original>
// kernel: tpu_custom_call.1
$region0: #{tpu_custom_call.1}
  #allocation0 [shape = 'u32[]', space=smem, size = 0x4, offset = 0x4, fixed_abs, tag = 'smem constant byte address 0x4 - core index']
  #allocation1 [shape = 'u32[144,128]{1,0:T(1,128)}', space=vmem, size = 0x12000, scoped, tag = 'internal scratch']
  #allocation2 [shape = 'f32[1,1]{1,0:T(1,128)S(1)}', space=vmem, size = 0x200, scoped, tag = 'scoped memory for tpu_custom_call.1']
  #allocation3 [shape = 'f32[1,1]{1,0:T(1,128)S(1)}', space=vmem, size = 0x200, scoped, tag = 'scoped memory for tpu_custom_call.1']
  %s0 = inlined_call_operand.hbm [shape: f32[16,128], index: 0, kind: input, shape index: {}]
  %s1 = inlined_call_operand.vmem [shape: f32[1,128], index: 1, kind: input, shape index: {}]
  %s2 = inlined_call_operand.vmem [shape: f32[1,512], index: 2, kind: input, shape index: {}]
  %s3 = inlined_call_operand.hbm [shape: bf16[128,512], index: 3, kind: input, shape index: {}]
  %s4 = inlined_call_operand.hbm [shape: bf16[128,512], index: 4, kind: input, shape index: {}]
  %s5 = inlined_call_operand.hbm [shape: bf16[512,128], index: 5, kind: input, shape index: {}]
  %s6 = inlined_call_operand.<no memory space> [shape: f32[1,1], index: 6, kind: input, shape index: {}]
  %s7 = inlined_call_operand.<no memory space> [shape: f32[1,1], index: 7, kind: input, shape index: {}]
  %s8 = inlined_call_operand.hbm [shape: f32[16,128], index: 8, kind: output, shape index: {}]
  %s9 = sld [smem:[#allocation0]]
  $region81: #{tpu_custom_call.1} parent=0
    _
  %s11 = ssub.s32 1, %s9
  %s12 = scalar_select 0, %s11, %s9
  %v13 = vstv %s6
  %14 = vst [vmem:[#allocation2] sm:$0x1] %v13
  %v15 = vstv %s7
  %16 = vst [vmem:[#allocation3] sm:$0x1] %v15
  $region1: #{tpu_custom_call.1} parent=0
    #allocation4 [shape = 'u8[8192]{0}', space=vmem, size = 0x2000, scoped, tag = 'input window, operand 0']
    #allocation5 [shape = 's32[2]{0}', space=sflag, size = 0x8, scoped, tag = 'scoped memory for tpu_custom_call.1']
    #allocation6 [shape = 's32[2]{0}', space=sflag, size = 0x8, scoped, tag = 'scoped memory for tpu_custom_call.1']
    #allocation7 [shape = 'u8[131072]{0}', space=vmem, size = 0x20000, scoped, tag = 'input window, operand 3, single buffered']
    #allocation8 [shape = 's32[1]{0}', space=sflag, size = 0x4, scoped, tag = 'scoped memory for tpu_custom_call.1']
    #allocation9 [shape = 'u8[131072]{0}', space=vmem, size = 0x20000, scoped, tag = 'input window, operand 4, single buffered']
    #allocation10 [shape = 'u8[131072]{0}', space=vmem, size = 0x20000, scoped, tag = 'input window, operand 5, single buffered']
    #allocation11 [shape = 's32[1]{0}', space=sflag, size = 0x4, scoped, tag = 'scoped memory for tpu_custom_call.1']
    #allocation12 [shape = 'u8[8192]{0}', space=vmem, size = 0x2000, scoped, tag = 'output window, operand 0']
    %17 = vsyncpa [#allocation5], 0
    %s18 = scalar_lea.sflag [#allocation5], 1
    %19 = vsyncpa %s18, 0
    %20 = vsyncpa [#allocation8], 0
    %21 = vsyncpa [#allocation11], 0
    %22 = vsyncpa [#allocation6], 0
    %s23 = scalar_lea.sflag [#allocation6], 1
    %24 = vsyncpa %s23, 0
    loop: start=0, step=1, limit=4
    $region2: #{tpu_custom_call.1} parent=1 // loop_pre_header
      _
    $region3: #{tpu_custom_call.1} parent=1 // loop_header
      %s26 = sphi 0, %s30
      %p27 = scmp.ge.s32.totalorder %s26, 4
      %s36 = sphi 0, %s38
      %s39 = sphi 0, %s36
      %s40 = sphi 0, %s39
      %s56 = sphi 0, %s40
      %s60 = sphi 0, %s60
      %s62 = sphi 0, %s60
      %s63 = sphi 0, %s62
      %s77 = sphi 0, %s63
      %s81 = sphi 0, %s81
      %s83 = sphi 0, %s81
      %s84 = sphi 0, %s83
      %s98 = sphi 0, %s84
      %s102 = sphi 0, %s102
      %s104 = sphi 0, %s102
      %s105 = sphi 0, %s104
      %s119 = sphi 0, %s105
      %s123 = sphi 0, %s123
      %s125 = sphi 0, %s123
      %s126 = sphi 0, %s125
      %s140 = sphi 0, %s126
      %s144 = sphi 0, %s144
      %s146 = sphi 0, %s144
      %s147 = sphi 0, %s146
      %s161 = sphi 0, %s147
      %s165 = sphi 0, %s165
      %s167 = sphi 0, %s165
      %s168 = sphi 0, %s167
      %s182 = sphi 0, %s168
      %s186 = sphi 0, %s186
      %s188 = sphi 0, %s186
      %s189 = sphi 0, %s188
      %s203 = sphi 0, %s189
      %s209 = sphi 0, %s211
      %s212 = sphi 0, %s209
      %s213 = sphi 0, %s212
      %s229 = sphi 0, %s213
    $region4: #{tpu_custom_call.1} parent=1 // loop_header_branch
      %29 = sbr.rel (%p27) target = $region8
    $region5: #{tpu_custom_call.1} parent=1 // loop_body
      %s31 = ssub.s32 %s26, 1
      %s32 = ssub.s32 %s26, 2
      %s33 = sadd.s32 %s26, 1
      %s34 = ssub.s32 %s26, %s33
      %p35 = scmp.eq.s32.totalorder %s34, 0
      %s37 = sadd.s32 %s36, 1
      %s38 = scalar_select %p35, %s36, %s37
      %p41 = pneg %p35
      %p42 = scmp.eq.s32.totalorder %s26, 1
      %p43 = por %p41, %p42
      %p44 = scmp.ne.s32.totalorder %s36, %s39
      %p45 = scmp.eq.s32.totalorder %s26, 0
      %p46 = por %p44, %p45
      %p47 = scmp.ne.s32.totalorder %s36, %s39
      %p48 = scmp.eq.s32.totalorder %s31, 1
      %p49 = por %p47, %p48
      %p50 = scmp.ne.s32.totalorder %s39, %s40
      %p51 = scmp.eq.s32.totalorder %s31, 0
      %p52 = por %p50, %p51
      %p53 = scmp.ne.s32.totalorder %s39, %s40
      %p54 = scmp.eq.s32.totalorder %s32, 1
      %p55 = por %p53, %p54
      %p57 = scmp.ne.s32.totalorder %s40, %s56
      %p58 = scmp.eq.s32.totalorder %s32, 0
      %p59 = por %p57, %p58
      %s61 = sadd.s32 %s60, 1
      %p64 = scmp.eq.s32.totalorder %s26, 1
      %p65 = scmp.ne.s32.totalorder %s60, %s62
      %p66 = scmp.eq.s32.totalorder %s26, 0
      %p67 = por %p65, %p66
      %p68 = scmp.ne.s32.totalorder %s60, %s62
      %p69 = scmp.eq.s32.totalorder %s31, 1
      %p70 = por %p68, %p69
      %p71 = scmp.ne.s32.totalorder %s62, %s63
      %p72 = scmp.eq.s32.totalorder %s31, 0
      %p73 = por %p71, %p72
      %p74 = scmp.ne.s32.totalorder %s62, %s63
      %p75 = scmp.eq.s32.totalorder %s32, 1
      %p76 = por %p74, %p75
      %p78 = scmp.ne.s32.totalorder %s63, %s77
      %p79 = scmp.eq.s32.totalorder %s32, 0
      %p80 = por %p78, %p79
      %s82 = sadd.s32 %s81, 1
      %p85 = scmp.eq.s32.totalorder %s26, 1
      %p86 = scmp.ne.s32.totalorder %s81, %s83
      %p87 = scmp.eq.s32.totalorder %s26, 0
      %p88 = por %p86, %p87
      %p89 = scmp.ne.s32.totalorder %s81, %s83
      %p90 = scmp.eq.s32.totalorder %s31, 1
      %p91 = por %p89, %p90
      %p92 = scmp.ne.s32.totalorder %s83, %s84
      %p93 = scmp.eq.s32.totalorder %s31, 0
      %p94 = por %p92, %p93
      %p95 = scmp.ne.s32.totalorder %s83, %s84
      %p96 = scmp.eq.s32.totalorder %s32, 1
      %p97 = por %p95, %p96
      %p99 = scmp.ne.s32.totalorder %s84, %s98
      %p100 = scmp.eq.s32.totalorder %s32, 0
      %p101 = por %p99, %p100
      %s103 = sadd.s32 %s102, 1
      %p106 = scmp.eq.s32.totalorder %s26, 1
      %p107 = scmp.ne.s32.totalorder %s102, %s104
      %p108 = scmp.eq.s32.totalorder %s26, 0
      %p109 = por %p107, %p108
      %p110 = scmp.ne.s32.totalorder %s102, %s104
      %p111 = scmp.eq.s32.totalorder %s31, 1
      %p112 = por %p110, %p111
      %p113 = scmp.ne.s32.totalorder %s104, %s105
      %p114 = scmp.eq.s32.totalorder %s31, 0
      %p115 = por %p113, %p114
      %p116 = scmp.ne.s32.totalorder %s104, %s105
      %p117 = scmp.eq.s32.totalorder %s32, 1
      %p118 = por %p116, %p117
      %p120 = scmp.ne.s32.totalorder %s105, %s119
      %p121 = scmp.eq.s32.totalorder %s32, 0
      %p122 = por %p120, %p121
      %s124 = sadd.s32 %s123, 1
      %p127 = scmp.eq.s32.totalorder %s26, 1
      %p128 = scmp.ne.s32.totalorder %s123, %s125
      %p129 = scmp.eq.s32.totalorder %s26, 0
      %p130 = por %p128, %p129
      %p131 = scmp.ne.s32.totalorder %s123, %s125
      %p132 = scmp.eq.s32.totalorder %s31, 1
      %p133 = por %p131, %p132
      %p134 = scmp.ne.s32.totalorder %s125, %s126
      %p135 = scmp.eq.s32.totalorder %s31, 0
      %p136 = por %p134, %p135
      %p137 = scmp.ne.s32.totalorder %s125, %s126
      %p138 = scmp.eq.s32.totalorder %s32, 1
      %p139 = por %p137, %p138
      %p141 = scmp.ne.s32.totalorder %s126, %s140
      %p142 = scmp.eq.s32.totalorder %s32, 0
      %p143 = por %p141, %p142
      %s145 = sadd.s32 %s144, 1
      %p148 = scmp.eq.s32.totalorder %s26, 1
      %p149 = scmp.ne.s32.totalorder %s144, %s146
      %p150 = scmp.eq.s32.totalorder %s26, 0
      %p151 = por %p149, %p150
      %p152 = scmp.ne.s32.totalorder %s144, %s146
      %p153 = scmp.eq.s32.totalorder %s31, 1
      %p154 = por %p152, %p153
      %p155 = scmp.ne.s32.totalorder %s146, %s147
      %p156 = scmp.eq.s32.totalorder %s31, 0
      %p157 = por %p155, %p156
      %p158 = scmp.ne.s32.totalorder %s146, %s147
      %p159 = scmp.eq.s32.totalorder %s32, 1
      %p160 = por %p158, %p159
      %p162 = scmp.ne.s32.totalorder %s147, %s161
      %p163 = scmp.eq.s32.totalorder %s32, 0
      %p164 = por %p162, %p163
      %s166 = sadd.s32 %s165, 1
      %p169 = scmp.eq.s32.totalorder %s26, 1
      %p170 = scmp.ne.s32.totalorder %s165, %s167
      %p171 = scmp.eq.s32.totalorder %s26, 0
      %p172 = por %p170, %p171
      %p173 = scmp.ne.s32.totalorder %s165, %s167
      %p174 = scmp.eq.s32.totalorder %s31, 1
      %p175 = por %p173, %p174
      %p176 = scmp.ne.s32.totalorder %s167, %s168
      %p177 = scmp.eq.s32.totalorder %s31, 0
      %p178 = por %p176, %p177
      %p179 = scmp.ne.s32.totalorder %s167, %s168
      %p180 = scmp.eq.s32.totalorder %s32, 1
      %p181 = por %p179, %p180
      %p183 = scmp.ne.s32.totalorder %s168, %s182
      %p184 = scmp.eq.s32.totalorder %s32, 0
      %p185 = por %p183, %p184
      %s187 = sadd.s32 %s186, 1
      %p190 = scmp.eq.s32.totalorder %s26, 1
      %p191 = scmp.ne.s32.totalorder %s186, %s188
      %p192 = scmp.eq.s32.totalorder %s26, 0
      %p193 = por %p191, %p192
      %p194 = scmp.ne.s32.totalorder %s186, %s188
      %p195 = scmp.eq.s32.totalorder %s31, 1
      %p196 = por %p194, %p195
      %p197 = scmp.ne.s32.totalorder %s188, %s189
      %p198 = scmp.eq.s32.totalorder %s31, 0
      %p199 = por %p197, %p198
      %p200 = scmp.ne.s32.totalorder %s188, %s189
      %p201 = scmp.eq.s32.totalorder %s32, 1
      %p202 = por %p200, %p201
      %p204 = scmp.ne.s32.totalorder %s189, %s203
      %p205 = scmp.eq.s32.totalorder %s32, 0
      %p206 = por %p204, %p205
      %s207 = ssub.s32 %s26, %s33
      %p208 = scmp.eq.s32.totalorder %s207, 0
      %s210 = sadd.s32 %s209, 1
      %s211 = scalar_select %p208, %s209, %s210
      %p214 = pneg %p208
      %p215 = scmp.eq.s32.totalorder %s26, 1
      %p216 = por %p214, %p215
      %p217 = scmp.ne.s32.totalorder %s209, %s212
      %p218 = scmp.eq.s32.totalorder %s26, 0
      %p219 = por %p217, %p218
      %p220 = scmp.ne.s32.totalorder %s209, %s212
      %p221 = scmp.eq.s32.totalorder %s31, 1
      %p222 = por %p220, %p221
      %p223 = scmp.ne.s32.totalorder %s212, %s213
      %p224 = scmp.eq.s32.totalorder %s31, 0
      %p225 = por %p223, %p224
      %p226 = scmp.ne.s32.totalorder %s212, %s213
      %p227 = scmp.eq.s32.totalorder %s32, 1
      %p228 = por %p226, %p227
      %p230 = scmp.ne.s32.totalorder %s213, %s229
      %p231 = scmp.eq.s32.totalorder %s32, 0
      %p232 = por %p230, %p231
      %p233 = scmp.le.s32.totalorder 1, %s26
      %p234 = scmp.lt.s32.totalorder %s26, 3
      %p235 = pnand %p233, %p234
      %p236 = pneg %p235
      // Predicated region
      $region9: #{tpu_custom_call.1} parent=5 // pred_check
        _
      $region10: #{tpu_custom_call.1} parent=5 // pred_check_branch
        %238 = sbr.rel (%p235) target = $region12
      $region11: #{tpu_custom_call.1} parent=5 // pred_region
        %s239 = ssub.s32 %s26, 1
        // Predicated region
        $region13: #{tpu_custom_call.1} parent=11 // pred_check
          %p240 = pneg %p73
        $region14: #{tpu_custom_call.1} parent=11 // pred_check_branch
          %242 = sbr.rel (%p240) target = $region16
        $region15: #{tpu_custom_call.1} parent=11 // pred_region
          _
        $region16: #{tpu_custom_call.1} parent=11 // pred_fallthru
          _
        // Predicated region
        $region17: #{tpu_custom_call.1} parent=11 // pred_check
          %p243 = pneg %p94
        $region18: #{tpu_custom_call.1} parent=11 // pred_check_branch
          %245 = sbr.rel (%p243) target = $region20
        $region19: #{tpu_custom_call.1} parent=11 // pred_region
          _
        $region20: #{tpu_custom_call.1} parent=11 // pred_fallthru
          _
        // Predicated region
        $region21: #{tpu_custom_call.1} parent=11 // pred_check
          %p246 = pneg %p115
        $region22: #{tpu_custom_call.1} parent=11 // pred_check_branch
          %248 = sbr.rel (%p246) target = $region24
        $region23: #{tpu_custom_call.1} parent=11 // pred_region
          %s250 = ssub.s32 4096, 4096
          %251 = vsyncadd [#allocation8], %s250
          %s252 = sshll.u32 [#allocation7], 4
          %s253 = int_to_ptr.vmem [resolvable:$true] %s252
          %258 = dma.hbm_to_vmem [thread:$0]  %s3, 4096, %s253, [#allocation8], 256, 256, 16
        $region24: #{tpu_custom_call.1} parent=11 // pred_fallthru
          _
        // Predicated region
        $region25: #{tpu_custom_call.1} parent=11 // pred_check
          %p259 = pneg %p136
        $region26: #{tpu_custom_call.1} parent=11 // pred_check_branch
          %261 = sbr.rel (%p259) target = $region28
        $region27: #{tpu_custom_call.1} parent=11 // pred_region
          %s263 = ssub.s32 4096, 4096
          %264 = vsyncadd [#allocation8], %s263
          %s265 = sshll.u32 [#allocation9], 4
          %s266 = int_to_ptr.vmem [resolvable:$true] %s265
          %271 = dma.hbm_to_vmem [thread:$0]  %s4, 4096, %s266, [#allocation8], 256, 256, 16
        $region28: #{tpu_custom_call.1} parent=11 // pred_fallthru
          _
        // Predicated region
        $region29: #{tpu_custom_call.1} parent=11 // pred_check
          %p272 = pneg %p157
        $region30: #{tpu_custom_call.1} parent=11 // pred_check_branch
          %274 = sbr.rel (%p272) target = $region32
        $region31: #{tpu_custom_call.1} parent=11 // pred_region
          %s276 = ssub.s32 4096, 4096
          %277 = vsyncadd [#allocation11], %s276
          %s278 = sshll.u32 [#allocation10], 4
          %s279 = int_to_ptr.vmem [resolvable:$true] %s278
          %284 = dma.hbm_to_vmem [thread:$0]  %s5, 4096, %s279, [#allocation11], 64, 64, 4
        $region32: #{tpu_custom_call.1} parent=11 // pred_fallthru
          _
        // Predicated region
        $region33: #{tpu_custom_call.1} parent=11 // pred_check
          %p285 = pneg %p178
        $region34: #{tpu_custom_call.1} parent=11 // pred_check_branch
          %287 = sbr.rel (%p285) target = $region36
        $region35: #{tpu_custom_call.1} parent=11 // pred_region
          _
        $region36: #{tpu_custom_call.1} parent=11 // pred_fallthru
          _
        // Predicated region
        $region37: #{tpu_custom_call.1} parent=11 // pred_check
          %p288 = pneg %p199
        $region38: #{tpu_custom_call.1} parent=11 // pred_check_branch
          %290 = sbr.rel (%p288) target = $region40
        $region39: #{tpu_custom_call.1} parent=11 // pred_region
          _
        $region40: #{tpu_custom_call.1} parent=11 // pred_fallthru
          _
      $region12: #{tpu_custom_call.1} parent=5 // pred_fallthru
        _
      %p291 = scmp.lt.s32.totalorder %s26, 2
      // Predicated region
      $region41: #{tpu_custom_call.1} parent=5 // pred_check
        %p292 = pneg %p291
      $region42: #{tpu_custom_call.1} parent=5 // pred_check_branch
        %294 = sbr.rel (%p292) target = $region44
      $region43: #{tpu_custom_call.1} parent=5 // pred_region
        // Predicated region
        $region45: #{tpu_custom_call.1} parent=43 // pred_check
          %p295 = pneg %p46
        $region46: #{tpu_custom_call.1} parent=43 // pred_check_branch
          %297 = sbr.rel (%p295) target = $region48
        $region47: #{tpu_custom_call.1} parent=43 // pred_region
          %s298 = sand.u32 %s36, 1
          %s299 = scalar_lea.sflag [#allocation5], %s298
          %s300 = sand.u32 %s36, 1
          %s301 = smul.addr %s300, 8
          %s302 = scalar_lea.vmem [#allocation4], %s301
          %s304 = ssub.s32 128, 128
          %305 = vsyncadd %s299, %s304
          %s306 = smul.addr %s26, 128
          %s307 = scalar_lea.hbm %s0, %s306
          %s309 = sshll.u32 %s302, 4
          %s310 = int_to_ptr.vmem [resolvable:$true] %s309
          %312 = dma.hbm_to_vmem [thread:$0]  %s307, 128, %s310, %s299
        $region48: #{tpu_custom_call.1} parent=43 // pred_fallthru
          _
      $region44: #{tpu_custom_call.1} parent=5 // pred_fallthru
        _
      %p313 = scmp.le.s32.totalorder 1, %s26
      %p314 = scmp.lt.s32.totalorder %s26, 3
      %p315 = pnand %p313, %p314
      %p316 = pneg %p315
      // Predicated region
      $region49: #{tpu_custom_call.1} parent=5 // pred_check
        _
      $region50: #{tpu_custom_call.1} parent=5 // pred_check_branch
        %318 = sbr.rel (%p315) target = $region52
      $region51: #{tpu_custom_call.1} parent=5 // pred_region
        %s319 = ssub.s32 %s26, 1
        %s320 = sand.u32 %s39, 1
        %s321 = scalar_lea.sflag [#allocation5], %s320
        %s322 = sand.u32 %s39, 1
        %s323 = smul.addr %s322, 8
        %s324 = scalar_lea.vmem [#allocation4], %s323
        // Predicated region
        $region53: #{tpu_custom_call.1} parent=51 // pred_check
          %p325 = pneg %p52
        $region54: #{tpu_custom_call.1} parent=51 // pred_check_branch
          %327 = sbr.rel (%p325) target = $region56
        $region55: #{tpu_custom_call.1} parent=51 // pred_region
          %328 = dma.done %s321, 128
        $region56: #{tpu_custom_call.1} parent=51 // pred_fallthru
          _
        // Predicated region
        $region57: #{tpu_custom_call.1} parent=51 // pred_check
          %p329 = pneg %p115
        $region58: #{tpu_custom_call.1} parent=51 // pred_check_branch
          %331 = sbr.rel (%p329) target = $region60
        $region59: #{tpu_custom_call.1} parent=51 // pred_region
          %332 = dma.done [#allocation8], 4096
        $region60: #{tpu_custom_call.1} parent=51 // pred_fallthru
          _
        // Predicated region
        $region61: #{tpu_custom_call.1} parent=51 // pred_check
          %p333 = pneg %p136
        $region62: #{tpu_custom_call.1} parent=51 // pred_check_branch
          %335 = sbr.rel (%p333) target = $region64
        $region63: #{tpu_custom_call.1} parent=51 // pred_region
          %336 = dma.done [#allocation8], 4096
        $region64: #{tpu_custom_call.1} parent=51 // pred_fallthru
          _
        // Predicated region
        $region65: #{tpu_custom_call.1} parent=51 // pred_check
          %p337 = pneg %p157
        $region66: #{tpu_custom_call.1} parent=51 // pred_check_branch
          %339 = sbr.rel (%p337) target = $region68
        $region67: #{tpu_custom_call.1} parent=51 // pred_region
          %340 = dma.done [#allocation11], 4096
        $region68: #{tpu_custom_call.1} parent=51 // pred_fallthru
          _
        %s341 = sand.u32 %s39, 1
        %s342 = scalar_lea.sflag [#allocation5], %s341
        %s343 = sand.u32 %s39, 1
        %s344 = smul.addr %s343, 8
        %s345 = scalar_lea.vmem [#allocation4], %s344
        %p346 = pneg %p52
        %p347 = pneg %p49
        %p348 = pneg %p73
        %p349 = pneg %p70
        %p350 = pneg %p94
        %p351 = pneg %p91
        %p352 = pneg %p115
        %p353 = pneg %p112
        %p354 = pneg %p136
        %p355 = pneg %p133
        %p356 = pneg %p157
        %p357 = pneg %p154
        %p358 = pneg %p178
        %p359 = pneg %p175
        %p360 = pneg %p199
        %p361 = pneg %p196
        %p362 = pneg %p225
        %p363 = pneg %p222
        %s364 = sand.u32 %s212, 1
        %s365 = scalar_lea.sflag [#allocation6], %s364
        %s366 = sand.u32 %s212, 1
        %s367 = smul.addr %s366, 8
        %s368 = scalar_lea.vmem [#allocation12], %s367
        %v370 = vld [vmem:[%s324] sm:$0xff]
        %v371 = vld [vmem:[%s1] sm:$0x1]
        %v372 = vmul.f32 %v370, %v370
        %373 = vadd.xlane.f32.xlu0 %v372
        %v374 = vpop.xlane.xlu0 %373
        %v375 = vrcp.pop 128.0
        %v376 = vmul.f32 %v374, %v375
        %v377 = vadd.f32 %v376, 1e-08
        %v378 = vrsqrt.pop %v377
        %v379 = vmul.f32 %v370, %v378
        %v381 = vlaneseq
        %v382 = vshrl.u32 %v381, 7
        %v383 = vsub.s32 0, %v382
        %v384 = vrot.slane %v371, %v383
        %v386 = vmul.f32 %v379, %v384
        %v387 = vand.u32 2147483647, %v386
        %388 = vmax.xlane.f32.xlu0 %v387
        %v389 = vpop.xlane.xlu0 %388
        %v390 = vmax.f32 %v389, 1e-05
        %v391 = vrcp.pop %v390
        %v392 = vmul.f32 127.0, %v391
        %v393 = vmul.f32 %v386, %v392
        %v394 = vround.ne.pseudo %v393
        %v395 = vmax.f32 %v394, -128.0
        %v396 = vmin.f32 %v395, 127.0
        %v397 = vmul.f32 %v390, 0.007874016
        %v398 = vld [vmem:[#allocation7] sm:$0xff]
        %v399 = vld [vmem:[#allocation7 + $0x8] sm:$0xff]
        %v400 = vld [vmem:[#allocation7 + $0x10] sm:$0xff]
        %v401 = vld [vmem:[#allocation7 + $0x18] sm:$0xff]
        %v402 = vld [vmem:[#allocation7 + $0x20] sm:$0xff]
        %v403 = vld [vmem:[#allocation7 + $0x28] sm:$0xff]
        %v404 = vld [vmem:[#allocation7 + $0x30] sm:$0xff]
        %v405 = vld [vmem:[#allocation7 + $0x38] sm:$0xff]
        %v406 = vld [vmem:[#allocation7 + $0x40] sm:$0xff]
        %v407 = vld [vmem:[#allocation7 + $0x48] sm:$0xff]
        %v408 = vld [vmem:[#allocation7 + $0x50] sm:$0xff]
        %v409 = vld [vmem:[#allocation7 + $0x58] sm:$0xff]
        %v410 = vld [vmem:[#allocation7 + $0x60] sm:$0xff]
        %v411 = vld [vmem:[#allocation7 + $0x68] sm:$0xff]
        %v412 = vld [vmem:[#allocation7 + $0x70] sm:$0xff]
        %v413 = vld [vmem:[#allocation7 + $0x78] sm:$0xff]
        %v414 = vld [vmem:[#allocation7 + $0x80] sm:$0xff]
        %v415 = vld [vmem:[#allocation7 + $0x88] sm:$0xff]
        %v416 = vld [vmem:[#allocation7 + $0x90] sm:$0xff]
        %v417 = vld [vmem:[#allocation7 + $0x98] sm:$0xff]
        %v418 = vld [vmem:[#allocation7 + $0xa0] sm:$0xff]
        %v419 = vld [vmem:[#allocation7 + $0xa8] sm:$0xff]
        %v420 = vld [vmem:[#allocation7 + $0xb0] sm:$0xff]
        %v421 = vld [vmem:[#allocation7 + $0xb8] sm:$0xff]
        %v422 = vld [vmem:[#allocation7 + $0xc0] sm:$0xff]
        %v423 = vld [vmem:[#allocation7 + $0xc8] sm:$0xff]
        %v424 = vld [vmem:[#allocation7 + $0xd0] sm:$0xff]
        %v425 = vld [vmem:[#allocation7 + $0xd8] sm:$0xff]
        %v426 = vld [vmem:[#allocation7 + $0xe0] sm:$0xff]
        %v427 = vld [vmem:[#allocation7 + $0xe8] sm:$0xff]
        %v428 = vld [vmem:[#allocation7 + $0xf0] sm:$0xff]
        %v429 = vld [vmem:[#allocation7 + $0xf8] sm:$0xff]
        %v430 = vpack.c.bf16 %v396, %v396
        %v463 = vunpack.c.l.b16 %v398
        %v464 = vunpack.c.h.b16 %v398
        %v465 = vunpack.c.l.b16 %v399
        %v466 = vunpack.c.h.b16 %v399
        %v467 = vunpack.c.l.b16 %v400
        %v468 = vunpack.c.h.b16 %v400
        %v469 = vunpack.c.l.b16 %v401
        %v470 = vunpack.c.h.b16 %v401
        %v471 = vunpack.c.l.b16 %v402
        %v472 = vunpack.c.h.b16 %v402
        %v473 = vunpack.c.l.b16 %v403
        %v474 = vunpack.c.h.b16 %v403
        %v475 = vunpack.c.l.b16 %v404
        %v476 = vunpack.c.h.b16 %v404
        %v477 = vunpack.c.l.b16 %v405
        %v478 = vunpack.c.h.b16 %v405
        %v479 = vunpack.c.l.b16 %v406
        %v480 = vunpack.c.h.b16 %v406
        %v481 = vunpack.c.l.b16 %v407
        %v482 = vunpack.c.h.b16 %v407
        %v483 = vunpack.c.l.b16 %v408
        %v484 = vunpack.c.h.b16 %v408
        %v485 = vunpack.c.l.b16 %v409
        %v486 = vunpack.c.h.b16 %v409
        %v487 = vunpack.c.l.b16 %v410
        %v488 = vunpack.c.h.b16 %v410
        %v489 = vunpack.c.l.b16 %v411
        %v490 = vunpack.c.h.b16 %v411
        %v491 = vunpack.c.l.b16 %v412
        %v492 = vunpack.c.h.b16 %v412
        %v493 = vunpack.c.l.b16 %v413
        %v494 = vunpack.c.h.b16 %v413
        %v495 = vunpack.c.l.b16 %v414
        %v496 = vunpack.c.h.b16 %v414
        %v497 = vunpack.c.l.b16 %v415
        %v498 = vunpack.c.h.b16 %v415
        %v499 = vunpack.c.l.b16 %v416
        %v500 = vunpack.c.h.b16 %v416
        %v501 = vunpack.c.l.b16 %v417
        %v502 = vunpack.c.h.b16 %v417
        %v503 = vunpack.c.l.b16 %v418
        %v504 = vunpack.c.h.b16 %v418
        %v505 = vunpack.c.l.b16 %v419
        %v506 = vunpack.c.h.b16 %v419
        %v507 = vunpack.c.l.b16 %v420
        %v508 = vunpack.c.h.b16 %v420
        %v509 = vunpack.c.l.b16 %v421
        %v510 = vunpack.c.h.b16 %v421
        %v511 = vunpack.c.l.b16 %v422
        %v512 = vunpack.c.h.b16 %v422
        %v513 = vunpack.c.l.b16 %v423
        %v514 = vunpack.c.h.b16 %v423
        %v515 = vunpack.c.l.b16 %v424
        %v516 = vunpack.c.h.b16 %v424
        %v517 = vunpack.c.l.b16 %v425
        %v518 = vunpack.c.h.b16 %v425
        %v519 = vunpack.c.l.b16 %v426
        %v520 = vunpack.c.h.b16 %v426
        %v521 = vunpack.c.l.b16 %v427
        %v522 = vunpack.c.h.b16 %v427
        %v523 = vunpack.c.l.b16 %v428
        %v524 = vunpack.c.h.b16 %v428
        %v525 = vunpack.c.l.b16 %v429
        %v526 = vunpack.c.h.b16 %v429
        %v527 = vpack.c.b16 %v467, %v463
        %v528 = vpack.c.b16 %v468, %v464
        %v529 = vpack.c.b16 %v469, %v465
        %v530 = vpack.c.b16 %v470, %v466
        %v531 = vpack.c.b16 %v475, %v471
        %v532 = vpack.c.b16 %v476, %v472
        %v533 = vpack.c.b16 %v477, %v473
        %v534 = vpack.c.b16 %v478, %v474
        %v535 = vpack.c.b16 %v483, %v479
        %v536 = vpack.c.b16 %v484, %v480
        %v537 = vpack.c.b16 %v485, %v481
        %v538 = vpack.c.b16 %v486, %v482
        %v539 = vpack.c.b16 %v491, %v487
        %v540 = vpack.c.b16 %v492, %v488
        %v541 = vpack.c.b16 %v493, %v489
        %v542 = vpack.c.b16 %v494, %v490
        %v543 = vpack.c.b16 %v499, %v495
        %v544 = vpack.c.b16 %v500, %v496
        %v545 = vpack.c.b16 %v501, %v497
        %v546 = vpack.c.b16 %v502, %v498
        %v547 = vpack.c.b16 %v507, %v503
        %v548 = vpack.c.b16 %v508, %v504
        %v549 = vpack.c.b16 %v509, %v505
        %v550 = vpack.c.b16 %v510, %v506
        %v551 = vpack.c.b16 %v515, %v511
        %v552 = vpack.c.b16 %v516, %v512
        %v553 = vpack.c.b16 %v517, %v513
        %v554 = vpack.c.b16 %v518, %v514
        %v555 = vpack.c.b16 %v523, %v519
        %v556 = vpack.c.b16 %v524, %v520
        %v557 = vpack.c.b16 %v525, %v521
        %v558 = vpack.c.b16 %v526, %v522
        %591 = vmatprep.subr.bf16.mxu0 %v556
        %592 = vmatpush1.bf16.msra.mxu0 %v555
        %593 = vmatprep.subr.bf16.mxu0 %v552
        %594 = vmatpush1.bf16.msra.mxu0 %v551
        %595 = vmatprep.subr.bf16.mxu0 %v548
        %596 = vmatpush1.bf16.msra.mxu0 %v547
        %597 = vmatprep.subr.bf16.mxu0 %v544
        %598 = vmatpush1.bf16.msra.mxu0 %v543
        %599 = vmatprep.subr.bf16.mxu0 %v540
        %600 = vmatpush1.bf16.msra.mxu0 %v539
        %601 = vmatprep.subr.bf16.mxu0 %v536
        %602 = vmatpush1.bf16.msra.mxu0 %v535
        %603 = vmatprep.subr.bf16.mxu0 %v532
        %604 = vmatpush1.bf16.msra.mxu0 %v531
        %605 = vmatprep.subr.bf16.mxu0 %v528
        %606 = vmatpush1.bf16.msra.mxu0 %v527
        %607 = vmatprep.subr.bf16.mxu0 0
        %608 = vmatpush2.bf16.msra.mxu0 0
        %609 = vmatprep.subr.bf16.mxu0 0
        %610 = vmatpush2.bf16.msra.mxu0 0
        %611 = vmatprep.subr.bf16.mxu0 0
        %612 = vmatpush2.bf16.msra.mxu0 0
        %613 = vmatprep.subr.bf16.mxu0 0
        %614 = vmatpush2.bf16.msra.mxu0 0
        %615 = vmatprep.subr.bf16.mxu0 0
        %616 = vmatpush2.bf16.msra.mxu0 0
        %617 = vmatprep.subr.bf16.mxu0 0
        %618 = vmatpush2.bf16.msra.mxu0 0
        %619 = vmatprep.subr.bf16.mxu0 0
        %620 = vmatpush2.bf16.msra.mxu0 0
        %621 = vmatprep.subr.bf16.mxu0 0
        %622 = vmatpush2.bf16.msra.mxu0 0
        %623 = vmatprep.mubr.bf16.mxu0 0
        %624 = vmatmul.mubr.bf16.gmra.mxu0 %v430
        %v625 = vpop.f32.mrf.mxu0
        %v626 = vadd.f32 0.0, %v625
        %v627 = vpop.f32.mrf.mxu0
        %v628 = vadd.f32 0.0, %v627
        %v629 = vpop.f32.mrf.mxu0
        %v630 = vpop.f32.mrf.mxu0
        %631 = vdwg.mxu0
        %632 = vmatprep.subr.bf16.mxu0 %v558
        %633 = vmatpush1.bf16.msra.mxu0 %v557
        %634 = vmatprep.subr.bf16.mxu0 %v554
        %635 = vmatpush1.bf16.msra.mxu0 %v553
        %636 = vmatprep.subr.bf16.mxu0 %v550
        %637 = vmatpush1.bf16.msra.mxu0 %v549
        %638 = vmatprep.subr.bf16.mxu0 %v546
        %639 = vmatpush1.bf16.msra.mxu0 %v545
        %640 = vmatprep.subr.bf16.mxu0 %v542
        %641 = vmatpush1.bf16.msra.mxu0 %v541
        %642 = vmatprep.subr.bf16.mxu0 %v538
        %643 = vmatpush1.bf16.msra.mxu0 %v537
        %644 = vmatprep.subr.bf16.mxu0 %v534
        %645 = vmatpush1.bf16.msra.mxu0 %v533
        %646 = vmatprep.subr.bf16.mxu0 %v530
        %647 = vmatpush1.bf16.msra.mxu0 %v529
        %648 = vmatprep.subr.bf16.mxu0 0
        %649 = vmatpush2.bf16.msra.mxu0 0
        %650 = vmatprep.subr.bf16.mxu0 0
        %651 = vmatpush2.bf16.msra.mxu0 0
        %652 = vmatprep.subr.bf16.mxu0 0
        %653 = vmatpush2.bf16.msra.mxu0 0
        %654 = vmatprep.subr.bf16.mxu0 0
        %655 = vmatpush2.bf16.msra.mxu0 0
        %656 = vmatprep.subr.bf16.mxu0 0
        %657 = vmatpush2.bf16.msra.mxu0 0
        %658 = vmatprep.subr.bf16.mxu0 0
        %659 = vmatpush2.bf16.msra.mxu0 0
        %660 = vmatprep.subr.bf16.mxu0 0
        %661 = vmatpush2.bf16.msra.mxu0 0
        %662 = vmatprep.subr.bf16.mxu0 0
        %663 = vmatpush2.bf16.msra.mxu0 0
        %664 = vmatprep.mubr.bf16.mxu0 0
        %665 = vmatmul.mubr.bf16.gmra.mxu0 %v430
        %v666 = vpop.f32.mrf.mxu0
        %v667 = vadd.f32 0.0, %v666
        %v668 = vpop.f32.mrf.mxu0
        %v669 = vadd.f32 0.0, %v668
        %v670 = vpop.f32.mrf.mxu0
        %v671 = vpop.f32.mrf.mxu0
        %672 = vdwg.mxu0
        %v673 = vld [vmem:[#allocation2] sm:$0x1]
        %v675 = vlaneseq
        %v676 = vshrl.u32 %v675, 7
        %v677 = vsub.s32 0, %v676
        %v678 = vrot.slane %v673, %v677
        %v680 = vmul.f32 %v397, %v678
        %682 = vset.pattern.permute.xlu0 0
        %683 = vperm.xlu0 %682, %v680
        %v684 = vpop.permute.xlu0 %683
        %v686 = vmul.f32 %v626, %v684
        %v687 = vmul.f32 %v628, %v684
        %v688 = vmul.f32 %v667, %v684
        %v689 = vmul.f32 %v669, %v684
        %v690 = vld [vmem:[#allocation9] sm:$0xff]
        %v691 = vld [vmem:[#allocation9 + $0x8] sm:$0xff]
        %v692 = vld [vmem:[#allocation9 + $0x10] sm:$0xff]
        %v693 = vld [vmem:[#allocation9 + $0x18] sm:$0xff]
        %v694 = vld [vmem:[#allocation9 + $0x20] sm:$0xff]
        %v695 = vld [vmem:[#allocation9 + $0x28] sm:$0xff]
        %v696 = vld [vmem:[#allocation9 + $0x30] sm:$0xff]
        %v697 = vld [vmem:[#allocation9 + $0x38] sm:$0xff]
        %v698 = vld [vmem:[#allocation9 + $0x40] sm:$0xff]
        %v699 = vld [vmem:[#allocation9 + $0x48] sm:$0xff]
        %v700 = vld [vmem:[#allocation9 + $0x50] sm:$0xff]
        %v701 = vld [vmem:[#allocation9 + $0x58] sm:$0xff]
        %v702 = vld [vmem:[#allocation9 + $0x60] sm:$0xff]
        %v703 = vld [vmem:[#allocation9 + $0x68] sm:$0xff]
        %v704 = vld [vmem:[#allocation9 + $0x70] sm:$0xff]
        %v705 = vld [vmem:[#allocation9 + $0x78] sm:$0xff]
        %v706 = vld [vmem:[#allocation9 + $0x80] sm:$0xff]
        %v707 = vld [vmem:[#allocation9 + $0x88] sm:$0xff]
        %v708 = vld [vmem:[#allocation9 + $0x90] sm:$0xff]
        %v709 = vld [vmem:[#allocation9 + $0x98] sm:$0xff]
        %v710 = vld [vmem:[#allocation9 + $0xa0] sm:$0xff]
        %v711 = vld [vmem:[#allocation9 + $0xa8] sm:$0xff]
        %v712 = vld [vmem:[#allocation9 + $0xb0] sm:$0xff]
        %v713 = vld [vmem:[#allocation9 + $0xb8] sm:$0xff]
        %v714 = vld [vmem:[#allocation9 + $0xc0] sm:$0xff]
        %v715 = vld [vmem:[#allocation9 + $0xc8] sm:$0xff]
        %v716 = vld [vmem:[#allocation9 + $0xd0] sm:$0xff]
        %v717 = vld [vmem:[#allocation9 + $0xd8] sm:$0xff]
        %v718 = vld [vmem:[#allocation9 + $0xe0] sm:$0xff]
        %v719 = vld [vmem:[#allocation9 + $0xe8] sm:$0xff]
        %v720 = vld [vmem:[#allocation9 + $0xf0] sm:$0xff]
        %v721 = vld [vmem:[#allocation9 + $0xf8] sm:$0xff]
        %v754 = vunpack.c.l.b16 %v690
        %v755 = vunpack.c.h.b16 %v690
        %v756 = vunpack.c.l.b16 %v691
        %v757 = vunpack.c.h.b16 %v691
        %v758 = vunpack.c.l.b16 %v692
        %v759 = vunpack.c.h.b16 %v692
        %v760 = vunpack.c.l.b16 %v693
        %v761 = vunpack.c.h.b16 %v693
        %v762 = vunpack.c.l.b16 %v694
        %v763 = vunpack.c.h.b16 %v694
        %v764 = vunpack.c.l.b16 %v695
        %v765 = vunpack.c.h.b16 %v695
        %v766 = vunpack.c.l.b16 %v696
        %v767 = vunpack.c.h.b16 %v696
        %v768 = vunpack.c.l.b16 %v697
        %v769 = vunpack.c.h.b16 %v697
        %v770 = vunpack.c.l.b16 %v698
        %v771 = vunpack.c.h.b16 %v698
        %v772 = vunpack.c.l.b16 %v699
        %v773 = vunpack.c.h.b16 %v699
        %v774 = vunpack.c.l.b16 %v700
        %v775 = vunpack.c.h.b16 %v700
        %v776 = vunpack.c.l.b16 %v701
        %v777 = vunpack.c.h.b16 %v701
        %v778 = vunpack.c.l.b16 %v702
        %v779 = vunpack.c.h.b16 %v702
        %v780 = vunpack.c.l.b16 %v703
        %v781 = vunpack.c.h.b16 %v703
        %v782 = vunpack.c.l.b16 %v704
        %v783 = vunpack.c.h.b16 %v704
        %v784 = vunpack.c.l.b16 %v705
        %v785 = vunpack.c.h.b16 %v705
        %v786 = vunpack.c.l.b16 %v706
        %v787 = vunpack.c.h.b16 %v706
        %v788 = vunpack.c.l.b16 %v707
        %v789 = vunpack.c.h.b16 %v707
        %v790 = vunpack.c.l.b16 %v708
        %v791 = vunpack.c.h.b16 %v708
        %v792 = vunpack.c.l.b16 %v709
        %v793 = vunpack.c.h.b16 %v709
        %v794 = vunpack.c.l.b16 %v710
        %v795 = vunpack.c.h.b16 %v710
        %v796 = vunpack.c.l.b16 %v711
        %v797 = vunpack.c.h.b16 %v711
        %v798 = vunpack.c.l.b16 %v712
        %v799 = vunpack.c.h.b16 %v712
        %v800 = vunpack.c.l.b16 %v713
        %v801 = vunpack.c.h.b16 %v713
        %v802 = vunpack.c.l.b16 %v714
        %v803 = vunpack.c.h.b16 %v714
        %v804 = vunpack.c.l.b16 %v715
        %v805 = vunpack.c.h.b16 %v715
        %v806 = vunpack.c.l.b16 %v716
        %v807 = vunpack.c.h.b16 %v716
        %v808 = vunpack.c.l.b16 %v717
        %v809 = vunpack.c.h.b16 %v717
        %v810 = vunpack.c.l.b16 %v718
        %v811 = vunpack.c.h.b16 %v718
        %v812 = vunpack.c.l.b16 %v719
        %v813 = vunpack.c.h.b16 %v719
        %v814 = vunpack.c.l.b16 %v720
        %v815 = vunpack.c.h.b16 %v720
        %v816 = vunpack.c.l.b16 %v721
        %v817 = vunpack.c.h.b16 %v721
        %v818 = vpack.c.b16 %v758, %v754
        %v819 = vpack.c.b16 %v759, %v755
        %v820 = vpack.c.b16 %v760, %v756
        %v821 = vpack.c.b16 %v761, %v757
        %v822 = vpack.c.b16 %v766, %v762
        %v823 = vpack.c.b16 %v767, %v763
        %v824 = vpack.c.b16 %v768, %v764
        %v825 = vpack.c.b16 %v769, %v765
        %v826 = vpack.c.b16 %v774, %v770
        %v827 = vpack.c.b16 %v775, %v771
        %v828 = vpack.c.b16 %v776, %v772
        %v829 = vpack.c.b16 %v777, %v773
        %v830 = vpack.c.b16 %v782, %v778
        %v831 = vpack.c.b16 %v783, %v779
        %v832 = vpack.c.b16 %v784, %v780
        %v833 = vpack.c.b16 %v785, %v781
        %v834 = vpack.c.b16 %v790, %v786
        %v835 = vpack.c.b16 %v791, %v787
        %v836 = vpack.c.b16 %v792, %v788
        %v837 = vpack.c.b16 %v793, %v789
        %v838 = vpack.c.b16 %v798, %v794
        %v839 = vpack.c.b16 %v799, %v795
        %v840 = vpack.c.b16 %v800, %v796
        %v841 = vpack.c.b16 %v801, %v797
        %v842 = vpack.c.b16 %v806, %v802
        %v843 = vpack.c.b16 %v807, %v803
        %v844 = vpack.c.b16 %v808, %v804
        %v845 = vpack.c.b16 %v809, %v805
        %v846 = vpack.c.b16 %v814, %v810
        %v847 = vpack.c.b16 %v815, %v811
        %v848 = vpack.c.b16 %v816, %v812
        %v849 = vpack.c.b16 %v817, %v813
        %882 = vmatprep.subr.bf16.mxu0 %v847
        %883 = vmatpush1.bf16.msra.mxu0 %v846
        %884 = vmatprep.subr.bf16.mxu0 %v843
        %885 = vmatpush1.bf16.msra.mxu0 %v842
        %886 = vmatprep.subr.bf16.mxu0 %v839
        %887 = vmatpush1.bf16.msra.mxu0 %v838
        %888 = vmatprep.subr.bf16.mxu0 %v835
        %889 = vmatpush1.bf16.msra.mxu0 %v834
        %890 = vmatprep.subr.bf16.mxu0 %v831
        %891 = vmatpush1.bf16.msra.mxu0 %v830
        %892 = vmatprep.subr.bf16.mxu0 %v827
        %893 = vmatpush1.bf16.msra.mxu0 %v826
        %894 = vmatprep.subr.bf16.mxu0 %v823
        %895 = vmatpush1.bf16.msra.mxu0 %v822
        %896 = vmatprep.subr.bf16.mxu0 %v819
        %897 = vmatpush1.bf16.msra.mxu0 %v818
        %898 = vmatprep.subr.bf16.mxu0 0
        %899 = vmatpush2.bf16.msra.mxu0 0
        %900 = vmatprep.subr.bf16.mxu0 0
        %901 = vmatpush2.bf16.msra.mxu0 0
        %902 = vmatprep.subr.bf16.mxu0 0
        %903 = vmatpush2.bf16.msra.mxu0 0
        %904 = vmatprep.subr.bf16.mxu0 0
        %905 = vmatpush2.bf16.msra.mxu0 0
        %906 = vmatprep.subr.bf16.mxu0 0
        %907 = vmatpush2.bf16.msra.mxu0 0
        %908 = vmatprep.subr.bf16.mxu0 0
        %909 = vmatpush2.bf16.msra.mxu0 0
        %910 = vmatprep.subr.bf16.mxu0 0
        %911 = vmatpush2.bf16.msra.mxu0 0
        %912 = vmatprep.subr.bf16.mxu0 0
        %913 = vmatpush2.bf16.msra.mxu0 0
        %914 = vmatprep.mubr.bf16.mxu0 0
        %915 = vmatmul.mubr.bf16.gmra.mxu0 %v430
        %v916 = vpop.f32.mrf.mxu0
        %v917 = vadd.f32 0.0, %v916
        %v918 = vpop.f32.mrf.mxu0
        %v919 = vadd.f32 0.0, %v918
        %v920 = vpop.f32.mrf.mxu0
        %v921 = vpop.f32.mrf.mxu0
        %922 = vdwg.mxu0
        %923 = vmatprep.subr.bf16.mxu0 %v849
        %924 = vmatpush1.bf16.msra.mxu0 %v848
        %925 = vmatprep.subr.bf16.mxu0 %v845
        %926 = vmatpush1.bf16.msra.mxu0 %v844
        %927 = vmatprep.subr.bf16.mxu0 %v841
        %928 = vmatpush1.bf16.msra.mxu0 %v840
        %929 = vmatprep.subr.bf16.mxu0 %v837
        %930 = vmatpush1.bf16.msra.mxu0 %v836
        %931 = vmatprep.subr.bf16.mxu0 %v833
        %932 = vmatpush1.bf16.msra.mxu0 %v832
        %933 = vmatprep.subr.bf16.mxu0 %v829
        %934 = vmatpush1.bf16.msra.mxu0 %v828
        %935 = vmatprep.subr.bf16.mxu0 %v825
        %936 = vmatpush1.bf16.msra.mxu0 %v824
        %937 = vmatprep.subr.bf16.mxu0 %v821
        %938 = vmatpush1.bf16.msra.mxu0 %v820
        %939 = vmatprep.subr.bf16.mxu0 0
        %940 = vmatpush2.bf16.msra.mxu0 0
        %941 = vmatprep.subr.bf16.mxu0 0
        %942 = vmatpush2.bf16.msra.mxu0 0
        %943 = vmatprep.subr.bf16.mxu0 0
        %944 = vmatpush2.bf16.msra.mxu0 0
        %945 = vmatprep.subr.bf16.mxu0 0
        %946 = vmatpush2.bf16.msra.mxu0 0
        %947 = vmatprep.subr.bf16.mxu0 0
        %948 = vmatpush2.bf16.msra.mxu0 0
        %949 = vmatprep.subr.bf16.mxu0 0
        %950 = vmatpush2.bf16.msra.mxu0 0
        %951 = vmatprep.subr.bf16.mxu0 0
        %952 = vmatpush2.bf16.msra.mxu0 0
        %953 = vmatprep.subr.bf16.mxu0 0
        %954 = vmatpush2.bf16.msra.mxu0 0
        %955 = vmatprep.mubr.bf16.mxu0 0
        %956 = vmatmul.mubr.bf16.gmra.mxu0 %v430
        %v957 = vpop.f32.mrf.mxu0
        %v958 = vadd.f32 0.0, %v957
        %v959 = vpop.f32.mrf.mxu0
        %v960 = vadd.f32 0.0, %v959
        %v961 = vpop.f32.mrf.mxu0
        %v962 = vpop.f32.mrf.mxu0
        %963 = vdwg.mxu0
        %v964 = vxor.u32 %v686, 2147483648
        %v965 = vxor.u32 %v687, 2147483648
        %v966 = vxor.u32 %v688, 2147483648
        %v967 = vxor.u32 %v689, 2147483648
        %v968 = vmul.f32 %v964, 1.442695
        %v969 = vpow.pop %v968
        %v970 = vmul.f32 %v965, 1.442695
        %v971 = vpow.pop %v970
        %v972 = vmul.f32 %v966, 1.442695
        %v973 = vpow.pop %v972
        %v974 = vmul.f32 %v967, 1.442695
        %v975 = vpow.pop %v974
        %v976 = vadd.f32 %v969, 1.0
        %v977 = vadd.f32 %v971, 1.0
        %v978 = vadd.f32 %v973, 1.0
        %v979 = vadd.f32 %v975, 1.0
        %v980 = vrcp.pop %v976
        %v981 = vmul.f32 1.0, %v980
        %v982 = vrcp.pop %v977
        %v983 = vmul.f32 1.0, %v982
        %v984 = vrcp.pop %v978
        %v985 = vmul.f32 1.0, %v984
        %v986 = vrcp.pop %v979
        %v987 = vmul.f32 1.0, %v986
        %v988 = vmul.f32 %v686, %v981
        %v989 = vmul.f32 %v687, %v983
        %v990 = vmul.f32 %v688, %v985
        %v991 = vmul.f32 %v689, %v987
        %v992 = vmul.f32 %v988, %v917
        %v993 = vmul.f32 %v989, %v919
        %v994 = vmul.f32 %v990, %v958
        %v995 = vmul.f32 %v991, %v960
        %v996 = vld [vmem:[%s2] sm:$0xf]
        %v997 = vmul.f32 %v992, %v992
        %v998 = vmul.f32 %v993, %v993
        %v999 = vmul.f32 %v994, %v994
        %v1000 = vmul.f32 %v995, %v995
        %v1001 = vadd.f32 %v997, %v998
        %v1002 = vadd.f32 %v1001, %v999
        %v1003 = vadd.f32 %v1002, %v1000
        %1004 = vadd.xlane.f32.xlu0 %v1003
        %v1005 = vpop.xlane.xlu0 %1004
        %v1006 = vrcp.pop 512.0
        %v1007 = vmul.f32 %v1005, %v1006
        %v1008 = vadd.f32 %v1007, 1e-08
        %v1009 = vrsqrt.pop %v1008
        %v1010 = vmul.f32 %v992, %v1009
        %v1011 = vmul.f32 %v993, %v1009
        %v1012 = vmul.f32 %v994, %v1009
        %v1013 = vmul.f32 %v995, %v1009
        %v1015 = vlaneseq
        %v1016 = vshrl.u32 %v1015, 7
        %v1017 = vsub.s32 0, %v1016
        %v1018 = vrot.slane %v996, %v1017
        %v1019 = vlaneseq
        %v1020 = vshrl.u32 %v1019, 7
        %v1021 = vsub.s32 1, %v1020
        %v1022 = vrot.slane %v996, %v1021
        %v1023 = vlaneseq
        %v1024 = vshrl.u32 %v1023, 7
        %v1025 = vsub.s32 2, %v1024
        %v1026 = vrot.slane %v996, %v1025
        %v1027 = vlaneseq
        %v1028 = vshrl.u32 %v1027, 7
        %v1029 = vsub.s32 3, %v1028
        %v1030 = vrot.slane %v996, %v1029
        %v1035 = vmul.f32 %v1010, %v1018
        %v1036 = vmul.f32 %v1011, %v1022
        %v1037 = vmul.f32 %v1012, %v1026
        %v1038 = vmul.f32 %v1013, %v1030
        %v1039 = vand.u32 2147483647, %v1035
        %v1040 = vand.u32 2147483647, %v1036
        %v1041 = vand.u32 2147483647, %v1037
        %v1042 = vand.u32 2147483647, %v1038
        %v1043 = vmax.f32 %v1039, %v1040
        %v1044 = vmax.f32 %v1041, %v1042
        %v1045 = vmax.f32 %v1043, %v1044
        %1046 = vmax.xlane.f32.xlu0 %v1045
        %v1047 = vpop.xlane.xlu0 %1046
        %v1048 = vmax.f32 %v1047, 1e-05
        %v1049 = vrcp.pop %v1048
        %v1050 = vmul.f32 127.0, %v1049
        %v1051 = vmul.f32 %v1035, %v1050
        %v1052 = vmul.f32 %v1036, %v1050
        %v1053 = vmul.f32 %v1037, %v1050
        %v1054 = vmul.f32 %v1038, %v1050
        %v1055 = vround.ne.pseudo %v1051
        %v1056 = vround.ne.pseudo %v1052
        %v1057 = vround.ne.pseudo %v1053
        %v1058 = vround.ne.pseudo %v1054
        %v1059 = vmax.f32 %v1055, -128.0
        %v1060 = vmax.f32 %v1056, -128.0
        %v1061 = vmax.f32 %v1057, -128.0
        %v1062 = vmax.f32 %v1058, -128.0
        %v1063 = vmin.f32 %v1059, 127.0
        %v1064 = vmin.f32 %v1060, 127.0
        %v1065 = vmin.f32 %v1061, 127.0
        %v1066 = vmin.f32 %v1062, 127.0
        %v1067 = vmul.f32 %v1048, 0.007874016
        %v1068 = vld [vmem:[#allocation10] sm:$0xf]
        %v1069 = vld [vmem:[#allocation10 + $0x4] sm:$0xf]
        %v1070 = vld [vmem:[#allocation10 + $0x8] sm:$0xf]
        %v1071 = vld [vmem:[#allocation10 + $0xc] sm:$0xf]
        %v1072 = vld [vmem:[#allocation10 + $0x10] sm:$0xf]
        %v1073 = vld [vmem:[#allocation10 + $0x14] sm:$0xf]
        %v1074 = vld [vmem:[#allocation10 + $0x18] sm:$0xf]
        %v1075 = vld [vmem:[#allocation10 + $0x1c] sm:$0xf]
        %v1076 = vld [vmem:[#allocation10 + $0x20] sm:$0xf]
        %v1077 = vld [vmem:[#allocation10 + $0x24] sm:$0xf]
        %v1078 = vld [vmem:[#allocation10 + $0x28] sm:$0xf]
        %v1079 = vld [vmem:[#allocation10 + $0x2c] sm:$0xf]
        %v1080 = vld [vmem:[#allocation10 + $0x30] sm:$0xf]
        %v1081 = vld [vmem:[#allocation10 + $0x34] sm:$0xf]
        %v1082 = vld [vmem:[#allocation10 + $0x38] sm:$0xf]
        %v1083 = vld [vmem:[#allocation10 + $0x3c] sm:$0xf]
        %v1084 = vld [vmem:[#allocation10 + $0x40] sm:$0xf]
        %v1085 = vld [vmem:[#allocation10 + $0x44] sm:$0xf]
        %v1086 = vld [vmem:[#allocation10 + $0x48] sm:$0xf]
        %v1087 = vld [vmem:[#allocation10 + $0x4c] sm:$0xf]
        %v1088 = vld [vmem:[#allocation10 + $0x50] sm:$0xf]
        %v1089 = vld [vmem:[#allocation10 + $0x54] sm:$0xf]
        %v1090 = vld [vmem:[#allocation10 + $0x58] sm:$0xf]
        %v1091 = vld [vmem:[#allocation10 + $0x5c] sm:$0xf]
        %v1092 = vld [vmem:[#allocation10 + $0x60] sm:$0xf]
        %v1093 = vld [vmem:[#allocation10 + $0x64] sm:$0xf]
        %v1094 = vld [vmem:[#allocation10 + $0x68] sm:$0xf]
        %v1095 = vld [vmem:[#allocation10 + $0x6c] sm:$0xf]
        %v1096 = vld [vmem:[#allocation10 + $0x70] sm:$0xf]
        %v1097 = vld [vmem:[#allocation10 + $0x74] sm:$0xf]
        %v1098 = vld [vmem:[#allocation10 + $0x78] sm:$0xf]
        %v1099 = vld [vmem:[#allocation10 + $0x7c] sm:$0xf]
        %v1100 = vld [vmem:[#allocation10 + $0x80] sm:$0xf]
        %v1101 = vld [vmem:[#allocation10 + $0x84] sm:$0xf]
        %v1102 = vld [vmem:[#allocation10 + $0x88] sm:$0xf]
        %v1103 = vld [vmem:[#allocation10 + $0x8c] sm:$0xf]
        %v1104 = vld [vmem:[#allocation10 + $0x90] sm:$0xf]
        %v1105 = vld [vmem:[#allocation10 + $0x94] sm:$0xf]
        %v1106 = vld [vmem:[#allocation10 + $0x98] sm:$0xf]
        %v1107 = vld [vmem:[#allocation10 + $0x9c] sm:$0xf]
        %v1108 = vld [vmem:[#allocation10 + $0xa0] sm:$0xf]
        %v1109 = vld [vmem:[#allocation10 + $0xa4] sm:$0xf]
        %v1110 = vld [vmem:[#allocation10 + $0xa8] sm:$0xf]
        %v1111 = vld [vmem:[#allocation10 + $0xac] sm:$0xf]
        %v1112 = vld [vmem:[#allocation10 + $0xb0] sm:$0xf]
        %v1113 = vld [vmem:[#allocation10 + $0xb4] sm:$0xf]
        %v1114 = vld [vmem:[#allocation10 + $0xb8] sm:$0xf]
        %v1115 = vld [vmem:[#allocation10 + $0xbc] sm:$0xf]
        %v1116 = vld [vmem:[#allocation10 + $0xc0] sm:$0xf]
        %v1117 = vld [vmem:[#allocation10 + $0xc4] sm:$0xf]
        %v1118 = vld [vmem:[#allocation10 + $0xc8] sm:$0xf]
        %v1119 = vld [vmem:[#allocation10 + $0xcc] sm:$0xf]
        %v1120 = vld [vmem:[#allocation10 + $0xd0] sm:$0xf]
        %v1121 = vld [vmem:[#allocation10 + $0xd4] sm:$0xf]
        %v1122 = vld [vmem:[#allocation10 + $0xd8] sm:$0xf]
        %v1123 = vld [vmem:[#allocation10 + $0xdc] sm:$0xf]
        %v1124 = vld [vmem:[#allocation10 + $0xe0] sm:$0xf]
        %v1125 = vld [vmem:[#allocation10 + $0xe4] sm:$0xf]
        %v1126 = vld [vmem:[#allocation10 + $0xe8] sm:$0xf]
        %v1127 = vld [vmem:[#allocation10 + $0xec] sm:$0xf]
        %v1128 = vld [vmem:[#allocation10 + $0xf0] sm:$0xf]
        %v1129 = vld [vmem:[#allocation10 + $0xf4] sm:$0xf]
        %v1130 = vld [vmem:[#allocation10 + $0xf8] sm:$0xf]
        %v1131 = vld [vmem:[#allocation10 + $0xfc] sm:$0xf]
        %v1132 = vpack.c.bf16 %v1063, %v1063
        %v1133 = vpack.c.bf16 %v1064, %v1064
        %v1134 = vpack.c.bf16 %v1065, %v1065
        %v1135 = vpack.c.bf16 %v1066, %v1066
        %v1200 = vunpack.c.l.b16 %v1068
        %v1201 = vunpack.c.l.b16 %v1069
        %v1202 = vunpack.c.l.b16 %v1070
        %v1203 = vunpack.c.l.b16 %v1071
        %v1204 = vunpack.c.l.b16 %v1072
        %v1205 = vunpack.c.l.b16 %v1073
        %v1206 = vunpack.c.l.b16 %v1074
        %v1207 = vunpack.c.l.b16 %v1075
        %v1208 = vunpack.c.l.b16 %v1076
        %v1209 = vunpack.c.l.b16 %v1077
        %v1210 = vunpack.c.l.b16 %v1078
        %v1211 = vunpack.c.l.b16 %v1079
        %v1212 = vunpack.c.l.b16 %v1080
        %v1213 = vunpack.c.l.b16 %v1081
        %v1214 = vunpack.c.l.b16 %v1082
        %v1215 = vunpack.c.l.b16 %v1083
        %v1216 = vunpack.c.l.b16 %v1084
        %v1217 = vunpack.c.l.b16 %v1085
        %v1218 = vunpack.c.l.b16 %v1086
        %v1219 = vunpack.c.l.b16 %v1087
        %v1220 = vunpack.c.l.b16 %v1088
        %v1221 = vunpack.c.l.b16 %v1089
        %v1222 = vunpack.c.l.b16 %v1090
        %v1223 = vunpack.c.l.b16 %v1091
        %v1224 = vunpack.c.l.b16 %v1092
        %v1225 = vunpack.c.l.b16 %v1093
        %v1226 = vunpack.c.l.b16 %v1094
        %v1227 = vunpack.c.l.b16 %v1095
        %v1228 = vunpack.c.l.b16 %v1096
        %v1229 = vunpack.c.l.b16 %v1097
        %v1230 = vunpack.c.l.b16 %v1098
        %v1231 = vunpack.c.l.b16 %v1099
        %v1232 = vunpack.c.l.b16 %v1100
        %v1233 = vunpack.c.l.b16 %v1101
        %v1234 = vunpack.c.l.b16 %v1102
        %v1235 = vunpack.c.l.b16 %v1103
        %v1236 = vunpack.c.l.b16 %v1104
        %v1237 = vunpack.c.l.b16 %v1105
        %v1238 = vunpack.c.l.b16 %v1106
        %v1239 = vunpack.c.l.b16 %v1107
        %v1240 = vunpack.c.l.b16 %v1108
        %v1241 = vunpack.c.l.b16 %v1109
        %v1242 = vunpack.c.l.b16 %v1110
        %v1243 = vunpack.c.l.b16 %v1111
        %v1244 = vunpack.c.l.b16 %v1112
        %v1245 = vunpack.c.l.b16 %v1113
        %v1246 = vunpack.c.l.b16 %v1114
        %v1247 = vunpack.c.l.b16 %v1115
        %v1248 = vunpack.c.l.b16 %v1116
        %v1249 = vunpack.c.l.b16 %v1117
        %v1250 = vunpack.c.l.b16 %v1118
        %v1251 = vunpack.c.l.b16 %v1119
        %v1252 = vunpack.c.l.b16 %v1120
        %v1253 = vunpack.c.l.b16 %v1121
        %v1254 = vunpack.c.l.b16 %v1122
        %v1255 = vunpack.c.l.b16 %v1123
        %v1256 = vunpack.c.l.b16 %v1124
        %v1257 = vunpack.c.l.b16 %v1125
        %v1258 = vunpack.c.l.b16 %v1126
        %v1259 = vunpack.c.l.b16 %v1127
        %v1260 = vunpack.c.l.b16 %v1128
        %v1261 = vunpack.c.l.b16 %v1129
        %v1262 = vunpack.c.l.b16 %v1130
        %v1263 = vunpack.c.l.b16 %v1131
        %v1264 = vpack.c.b16 %v1201, %v1200
        %v1265 = vpack.c.b16 %v1203, %v1202
        %v1266 = vpack.c.b16 %v1205, %v1204
        %v1267 = vpack.c.b16 %v1207, %v1206
        %v1268 = vpack.c.b16 %v1209, %v1208
        %v1269 = vpack.c.b16 %v1211, %v1210
        %v1270 = vpack.c.b16 %v1213, %v1212
        %v1271 = vpack.c.b16 %v1215, %v1214
        %v1272 = vpack.c.b16 %v1217, %v1216
        %v1273 = vpack.c.b16 %v1219, %v1218
        %v1274 = vpack.c.b16 %v1221, %v1220
        %v1275 = vpack.c.b16 %v1223, %v1222
        %v1276 = vpack.c.b16 %v1225, %v1224
        %v1277 = vpack.c.b16 %v1227, %v1226
        %v1278 = vpack.c.b16 %v1229, %v1228
        %v1279 = vpack.c.b16 %v1231, %v1230
        %v1280 = vpack.c.b16 %v1233, %v1232
        %v1281 = vpack.c.b16 %v1235, %v1234
        %v1282 = vpack.c.b16 %v1237, %v1236
        %v1283 = vpack.c.b16 %v1239, %v1238
        %v1284 = vpack.c.b16 %v1241, %v1240
        %v1285 = vpack.c.b16 %v1243, %v1242
        %v1286 = vpack.c.b16 %v1245, %v1244
        %v1287 = vpack.c.b16 %v1247, %v1246
        %v1288 = vpack.c.b16 %v1249, %v1248
        %v1289 = vpack.c.b16 %v1251, %v1250
        %v1290 = vpack.c.b16 %v1253, %v1252
        %v1291 = vpack.c.b16 %v1255, %v1254
        %v1292 = vpack.c.b16 %v1257, %v1256
        %v1293 = vpack.c.b16 %v1259, %v1258
        %v1294 = vpack.c.b16 %v1261, %v1260
        %v1295 = vpack.c.b16 %v1263, %v1262
        %1328 = vmatprep.subr.bf16.mxu0 0
        %1329 = vmatpush1.bf16.msra.mxu0 %v1271
        %1330 = vmatprep.subr.bf16.mxu0 0
        %1331 = vmatpush1.bf16.msra.mxu0 %v1270
        %1332 = vmatprep.subr.bf16.mxu0 0
        %1333 = vmatpush1.bf16.msra.mxu0 %v1269
        %1334 = vmatprep.subr.bf16.mxu0 0
        %1335 = vmatpush1.bf16.msra.mxu0 %v1268
        %1336 = vmatprep.subr.bf16.mxu0 0
        %1337 = vmatpush1.bf16.msra.mxu0 %v1267
        %1338 = vmatprep.subr.bf16.mxu0 0
        %1339 = vmatpush1.bf16.msra.mxu0 %v1266
        %1340 = vmatprep.subr.bf16.mxu0 0
        %1341 = vmatpush1.bf16.msra.mxu0 %v1265
        %1342 = vmatprep.subr.bf16.mxu0 0
        %1343 = vmatpush1.bf16.msra.mxu0 %v1264
        %1344 = vmatprep.subr.bf16.mxu0 0
        %1345 = vmatpush2.bf16.msra.mxu0 %v1279
        %1346 = vmatprep.subr.bf16.mxu0 0
        %1347 = vmatpush2.bf16.msra.mxu0 %v1278
        %1348 = vmatprep.subr.bf16.mxu0 0
        %1349 = vmatpush2.bf16.msra.mxu0 %v1277
        %1350 = vmatprep.subr.bf16.mxu0 0
        %1351 = vmatpush2.bf16.msra.mxu0 %v1276
        %1352 = vmatprep.subr.bf16.mxu0 0
        %1353 = vmatpush2.bf16.msra.mxu0 %v1275
        %1354 = vmatprep.subr.bf16.mxu0 0
        %1355 = vmatpush2.bf16.msra.mxu0 %v1274
        %1356 = vmatprep.subr.bf16.mxu0 0
        %1357 = vmatpush2.bf16.msra.mxu0 %v1273
        %1358 = vmatprep.subr.bf16.mxu0 0
        %1359 = vmatpush2.bf16.msra.mxu0 %v1272
        %1360 = vmatprep.mubr.bf16.mxu0 %v1133
        %1361 = vmatmul.mubr.bf16.gmra.mxu0 %v1132
        %v1362 = vpop.f32.mrf.mxu0
        %v1363 = vadd.f32 0.0, %v1362
        %v1364 = vpop.f32.mrf.mxu0
        %v1365 = vpop.f32.mrf.mxu0
        %v1366 = vpop.f32.mrf.mxu0
        %1367 = vdwg.mxu0
        %1368 = vmatprep.subr.bf16.mxu0 0
        %1369 = vmatpush1.bf16.msra.mxu0 %v1287
        %1370 = vmatprep.subr.bf16.mxu0 0
        %1371 = vmatpush1.bf16.msra.mxu0 %v1286
        %1372 = vmatprep.subr.bf16.mxu0 0
        %1373 = vmatpush1.bf16.msra.mxu0 %v1285
        %1374 = vmatprep.subr.bf16.mxu0 0
        %1375 = vmatpush1.bf16.msra.mxu0 %v1284
        %1376 = vmatprep.subr.bf16.mxu0 0
        %1377 = vmatpush1.bf16.msra.mxu0 %v1283
        %1378 = vmatprep.subr.bf16.mxu0 0
        %1379 = vmatpush1.bf16.msra.mxu0 %v1282
        %1380 = vmatprep.subr.bf16.mxu0 0
        %1381 = vmatpush1.bf16.msra.mxu0 %v1281
        %1382 = vmatprep.subr.bf16.mxu0 0
        %1383 = vmatpush1.bf16.msra.mxu0 %v1280
        %1384 = vmatprep.subr.bf16.mxu0 0
        %1385 = vmatpush2.bf16.msra.mxu0 %v1295
        %1386 = vmatprep.subr.bf16.mxu0 0
        %1387 = vmatpush2.bf16.msra.mxu0 %v1294
        %1388 = vmatprep.subr.bf16.mxu0 0
        %1389 = vmatpush2.bf16.msra.mxu0 %v1293
        %1390 = vmatprep.subr.bf16.mxu0 0
        %1391 = vmatpush2.bf16.msra.mxu0 %v1292
        %1392 = vmatprep.subr.bf16.mxu0 0
        %1393 = vmatpush2.bf16.msra.mxu0 %v1291
        %1394 = vmatprep.subr.bf16.mxu0 0
        %1395 = vmatpush2.bf16.msra.mxu0 %v1290
        %1396 = vmatprep.subr.bf16.mxu0 0
        %1397 = vmatpush2.bf16.msra.mxu0 %v1289
        %1398 = vmatprep.subr.bf16.mxu0 0
        %1399 = vmatpush2.bf16.msra.mxu0 %v1288
        %1400 = vmatprep.mubr.bf16.mxu0 %v1135
        %1401 = vmatmul.mubr.bf16.gmra.mxu0 %v1134
        %v1402 = vpop.f32.mrf.mxu0
        %v1403 = vadd.f32 %v1363, %v1402
        %v1404 = vpop.f32.mrf.mxu0
        %v1405 = vpop.f32.mrf.mxu0
        %v1406 = vpop.f32.mrf.mxu0
        %1407 = vdwg.mxu0
        %v1408 = vld [vmem:[#allocation3] sm:$0x1]
        %v1410 = vlaneseq
        %v1411 = vshrl.u32 %v1410, 7
        %v1412 = vsub.s32 0, %v1411
        %v1413 = vrot.slane %v1408, %v1412
        %v1415 = vmul.f32 %v1067, %v1413
        %1417 = vset.pattern.permute.xlu0 0
        %1418 = vperm.xlu0 %1417, %v1415
        %v1419 = vpop.permute.xlu0 %1418
        %v1421 = vmul.f32 %v1403, %v1419
        %1422 = vst [vmem:[%s368] sm:$0xff] %v1421
        %s1423 = sand.u32 %s212, 1
        %s1424 = scalar_lea.sflag [#allocation6], %s1423
        %s1425 = sand.u32 %s212, 1
        %s1426 = smul.addr %s1425, 8
        %s1427 = scalar_lea.vmem [#allocation12], %s1426
        // Predicated region
        $region69: #{tpu_custom_call.1} parent=51 // pred_check
          %p1428 = pneg %p222
        $region70: #{tpu_custom_call.1} parent=51 // pred_check_branch
          %1430 = sbr.rel (%p1428) target = $region72
        $region71: #{tpu_custom_call.1} parent=51 // pred_region
          %s1432 = ssub.s32 128, 128
          %1433 = vsyncadd %s1424, %s1432
          %s1434 = smul.addr %s31, 128
          %s1435 = scalar_lea.hbm %s8, %s1434
          %s1437 = sshll.u32 %s1427, 4
          %s1438 = int_to_ptr.vmem [resolvable:$true] %s1437
          %1440 = dma.vmem_to_hbm [thread:$0]  %s1438, 128, %s1435, %s1424
        $region72: #{tpu_custom_call.1} parent=51 // pred_fallthru
          _
      $region52: #{tpu_custom_call.1} parent=5 // pred_fallthru
        _
      %p1441 = scmp.le.s32.totalorder 2, %s26
      // Predicated region
      $region73: #{tpu_custom_call.1} parent=5 // pred_check
        %p1442 = pneg %p1441
      $region74: #{tpu_custom_call.1} parent=5 // pred_check_branch
        %1444 = sbr.rel (%p1442) target = $region76
      $region75: #{tpu_custom_call.1} parent=5 // pred_region
        %s1445 = ssub.s32 %s26, 2
        // Predicated region
        $region77: #{tpu_custom_call.1} parent=75 // pred_check
          %p1446 = pneg %p228
        $region78: #{tpu_custom_call.1} parent=75 // pred_check_branch
          %1448 = sbr.rel (%p1446) target = $region80
        $region79: #{tpu_custom_call.1} parent=75 // pred_region
          %s1449 = sand.u32 %s213, 1
          %s1450 = scalar_lea.sflag [#allocation6], %s1449
          %s1451 = sand.u32 %s213, 1
          %s1452 = smul.addr %s1451, 8
          %s1453 = scalar_lea.vmem [#allocation12], %s1452
          %1454 = dma.done %s1450, 128
        $region80: #{tpu_custom_call.1} parent=75 // pred_fallthru
          _
      $region76: #{tpu_custom_call.1} parent=5 // pred_fallthru
        _
    $region6: #{tpu_custom_call.1} parent=1 // loop_footer
      %s30 = sadd.s32 1, %s26
    $region7: #{tpu_custom_call.1} parent=1 // loop_footer_branch
      %25 = sbr.rel target = $region3
    $region8: #{tpu_custom_call.1} parent=1 // loop_exit
      _
    %1455 = vsyncpa [#allocation5], 1
    %s1456 = scalar_lea.sflag [#allocation5], 1
    %1457 = vsyncpa %s1456, 1
    %1458 = vsyncpa [#allocation8], 1
    %1459 = vsyncpa [#allocation11], 1
    %1460 = vsyncpa [#allocation6], 1
    %s1461 = scalar_lea.sflag [#allocation6], 1
    %1462 = vsyncpa %s1461, 1

// kernel: tpu_custom_call.1
$region0: #{tpu_custom_call.1}
  #allocation0 [shape = 'u32[]', space=smem, size = 0x4, offset = 0x4, fixed_abs, tag = 'smem constant byte address 0x4 - core index']
  #allocation1 [shape = 'u32[144,128]{1,0:T(1,128)}', space=vmem, size = 0x12000, scoped, tag = 'internal scratch']
  #allocation2 [shape = 'f32[1,1]{1,0:T(1,128)S(1)}', space=vmem, size = 0x200, scoped, tag = 'scoped memory for tpu_custom_call.1']
  #allocation3 [shape = 'f32[1,1]{1,0:T(1,128)S(1)}', space=vmem, size = 0x200, scoped, tag = 'scoped memory for tpu_custom_call.1']
  %s0 = inlined_call_operand.hbm [shape: f32[16,128], index: 0, kind: input, shape index: {}]
  %s1 = inlined_call_operand.vmem [shape: f32[1,128], index: 1, kind: input, shape index: {}]
  %s2 = inlined_call_operand.vmem [shape: f32[1,512], index: 2, kind: input, shape index: {}]
  %s3 = inlined_call_operand.hbm [shape: bf16[128,512], index: 3, kind: input, shape index: {}]
  %s4 = inlined_call_operand.hbm [shape: bf16[128,512], index: 4, kind: input, shape index: {}]
  %s5 = inlined_call_operand.hbm [shape: bf16[512,128], index: 5, kind: input, shape index: {}]
  %s6 = inlined_call_operand.<no memory space> [shape: f32[1,1], index: 6, kind: input, shape index: {}]
  %s7 = inlined_call_operand.<no memory space> [shape: f32[1,1], index: 7, kind: input, shape index: {}]
  %s8 = inlined_call_operand.hbm [shape: f32[16,128], index: 8, kind: output, shape index: {}]
  %s9 = sld [smem:[#allocation0]]
  $region81: #{tpu_custom_call.1} parent=0
    _
  %s11 = ssub.s32 1, %s9
  %s12 = scalar_select 0, %s11, %s9
  %v13 = vstv %s6
  %14 = vst [vmem:[#allocation2] sm:$0x1] %v13
  %v15 = vstv %s7
  %16 = vst [vmem:[#allocation3] sm:$0x1] %v15
  $region1: #{tpu_custom_call.1} parent=0
    #allocation4 [shape = 'u8[8192]{0}', space=vmem, size = 0x2000, scoped, tag = 'input window, operand 0']
    #allocation5 [shape = 's32[2]{0}', space=sflag, size = 0x8, scoped, tag = 'scoped memory for tpu_custom_call.1']
    #allocation6 [shape = 's32[2]{0}', space=sflag, size = 0x8, scoped, tag = 'scoped memory for tpu_custom_call.1']
    #allocation7 [shape = 'u8[131072]{0}', space=vmem, size = 0x20000, scoped, tag = 'input window, operand 3, single buffered']
    #allocation8 [shape = 's32[1]{0}', space=sflag, size = 0x4, scoped, tag = 'scoped memory for tpu_custom_call.1']
    #allocation9 [shape = 'u8[131072]{0}', space=vmem, size = 0x20000, scoped, tag = 'input window, operand 4, single buffered']
    #allocation10 [shape = 'u8[131072]{0}', space=vmem, size = 0x20000, scoped, tag = 'input window, operand 5, single buffered']
    #allocation11 [shape = 's32[1]{0}', space=sflag, size = 0x4, scoped, tag = 'scoped memory for tpu_custom_call.1']
    #allocation12 [shape = 'u8[8192]{0}', space=vmem, size = 0x2000, scoped, tag = 'output window, operand 0']
    %17 = vsyncpa [#allocation5], 0
    %s18 = scalar_lea.sflag [#allocation5], 1
    %19 = vsyncpa %s18, 0
    %20 = vsyncpa [#allocation8], 0
    %21 = vsyncpa [#allocation11], 0
    %22 = vsyncpa [#allocation6], 0
    %s23 = scalar_lea.sflag [#allocation6], 1
    %24 = vsyncpa %s23, 0
    loop: start=0, step=1, limit=4
    $region2: #{tpu_custom_call.1} parent=1 // loop_pre_header
      _
    $region3: #{tpu_custom_call.1} parent=1 // loop_header
      %s26 = sphi 0, %s30
      %p27 = scmp.ge.s32.totalorder %s26, 4
      %s36 = sphi 0, %s38
      %s39 = sphi 0, %s36
      %s40 = sphi 0, %s39
      %s56 = sphi 0, %s40
      %s60 = sphi 0, %s60
      %s62 = sphi 0, %s60
      %s63 = sphi 0, %s62
      %s77 = sphi 0, %s63
      %s81 = sphi 0, %s81
      %s83 = sphi 0, %s81
      %s84 = sphi 0, %s83
      %s98 = sphi 0, %s84
      %s102 = sphi 0, %s102
      %s104 = sphi 0, %s102
      %s105 = sphi 0, %s104
      %s119 = sphi 0, %s105
      %s123 = sphi 0, %s123
      %s125 = sphi 0, %s123
      %s126 = sphi 0, %s125
      %s140 = sphi 0, %s126
      %s144 = sphi 0, %s144
      %s146 = sphi 0, %s144
      %s147 = sphi 0, %s146
      %s161 = sphi 0, %s147
      %s165 = sphi 0, %s165
      %s167 = sphi 0, %s165
      %s168 = sphi 0, %s167
      %s182 = sphi 0, %s168
      %s186 = sphi 0, %s186
      %s188 = sphi 0, %s186
      %s189 = sphi 0, %s188
      %s203 = sphi 0, %s189
      %s209 = sphi 0, %s211
      %s212 = sphi 0, %s209
      %s213 = sphi 0, %s212
      %s229 = sphi 0, %s213
    $region4: #{tpu_custom_call.1} parent=1 // loop_header_branch
      %29 = sbr.rel (%p27) target = $region8
    $region5: #{tpu_custom_call.1} parent=1 // loop_body
      %s31 = ssub.s32 %s26, 1
      %s32 = ssub.s32 %s26, 2
      %s33 = sadd.s32 %s26, 1
      %s34 = ssub.s32 %s26, %s33
      %p35 = scmp.eq.s32.totalorder %s34, 0
      %s37 = sadd.s32 %s36, 1
      %s38 = scalar_select %p35, %s36, %s37
      %p41 = pneg %p35
      %p42 = scmp.eq.s32.totalorder %s26, 1
      %p43 = por %p41, %p42
      %p44 = scmp.ne.s32.totalorder %s36, %s39
      %p45 = scmp.eq.s32.totalorder %s26, 0
      %p46 = por %p44, %p45
      %p47 = scmp.ne.s32.totalorder %s36, %s39
      %p48 = scmp.eq.s32.totalorder %s31, 1
      %p49 = por %p47, %p48
      %p50 = scmp.ne.s32.totalorder %s39, %s40
      %p51 = scmp.eq.s32.totalorder %s31, 0
      %p52 = por %p50, %p51
      %p53 = scmp.ne.s32.totalorder %s39, %s40
      %p54 = scmp.eq.s32.totalorder %s32, 1
      %p55 = por %p53, %p54
      %p57 = scmp.ne.s32.totalorder %s40, %s56
      %p58 = scmp.eq.s32.totalorder %s32, 0
      %p59 = por %p57, %p58
      %s61 = sadd.s32 %s60, 1
      %p64 = scmp.eq.s32.totalorder %s26, 1
      %p65 = scmp.ne.s32.totalorder %s60, %s62
      %p66 = scmp.eq.s32.totalorder %s26, 0
      %p67 = por %p65, %p66
      %p68 = scmp.ne.s32.totalorder %s60, %s62
      %p69 = scmp.eq.s32.totalorder %s31, 1
      %p70 = por %p68, %p69
      %p71 = scmp.ne.s32.totalorder %s62, %s63
      %p72 = scmp.eq.s32.totalorder %s31, 0
      %p73 = por %p71, %p72
      %p74 = scmp.ne.s32.totalorder %s62, %s63
      %p75 = scmp.eq.s32.totalorder %s32, 1
      %p76 = por %p74, %p75
      %p78 = scmp.ne.s32.totalorder %s63, %s77
      %p79 = scmp.eq.s32.totalorder %s32, 0
      %p80 = por %p78, %p79
      %s82 = sadd.s32 %s81, 1
      %p85 = scmp.eq.s32.totalorder %s26, 1
      %p86 = scmp.ne.s32.totalorder %s81, %s83
      %p87 = scmp.eq.s32.totalorder %s26, 0
      %p88 = por %p86, %p87
      %p89 = scmp.ne.s32.totalorder %s81, %s83
      %p90 = scmp.eq.s32.totalorder %s31, 1
      %p91 = por %p89, %p90
      %p92 = scmp.ne.s32.totalorder %s83, %s84
      %p93 = scmp.eq.s32.totalorder %s31, 0
      %p94 = por %p92, %p93
      %p95 = scmp.ne.s32.totalorder %s83, %s84
      %p96 = scmp.eq.s32.totalorder %s32, 1
      %p97 = por %p95, %p96
      %p99 = scmp.ne.s32.totalorder %s84, %s98
      %p100 = scmp.eq.s32.totalorder %s32, 0
      %p101 = por %p99, %p100
      %s103 = sadd.s32 %s102, 1
      %p106 = scmp.eq.s32.totalorder %s26, 1
      %p107 = scmp.ne.s32.totalorder %s102, %s104
      %p108 = scmp.eq.s32.totalorder %s26, 0
      %p109 = por %p107, %p108
      %p110 = scmp.ne.s32.totalorder %s102, %s104
      %p111 = scmp.eq.s32.totalorder %s31, 1
      %p112 = por %p110, %p111
      %p113 = scmp.ne.s32.totalorder %s104, %s105
      %p114 = scmp.eq.s32.totalorder %s31, 0
      %p115 = por %p113, %p114
      %p116 = scmp.ne.s32.totalorder %s104, %s105
      %p117 = scmp.eq.s32.totalorder %s32, 1
      %p118 = por %p116, %p117
      %p120 = scmp.ne.s32.totalorder %s105, %s119
      %p121 = scmp.eq.s32.totalorder %s32, 0
      %p122 = por %p120, %p121
      %s124 = sadd.s32 %s123, 1
      %p127 = scmp.eq.s32.totalorder %s26, 1
      %p128 = scmp.ne.s32.totalorder %s123, %s125
      %p129 = scmp.eq.s32.totalorder %s26, 0
      %p130 = por %p128, %p129
      %p131 = scmp.ne.s32.totalorder %s123, %s125
      %p132 = scmp.eq.s32.totalorder %s31, 1
      %p133 = por %p131, %p132
      %p134 = scmp.ne.s32.totalorder %s125, %s126
      %p135 = scmp.eq.s32.totalorder %s31, 0
      %p136 = por %p134, %p135
      %p137 = scmp.ne.s32.totalorder %s125, %s126
      %p138 = scmp.eq.s32.totalorder %s32, 1
      %p139 = por %p137, %p138
      %p141 = scmp.ne.s32.totalorder %s126, %s140
      %p142 = scmp.eq.s32.totalorder %s32, 0
      %p143 = por %p141, %p142
      %s145 = sadd.s32 %s144, 1
      %p148 = scmp.eq.s32.totalorder %s26, 1
      %p149 = scmp.ne.s32.totalorder %s144, %s146
      %p150 = scmp.eq.s32.totalorder %s26, 0
      %p151 = por %p149, %p150
      %p152 = scmp.ne.s32.totalorder %s144, %s146
      %p153 = scmp.eq.s32.totalorder %s31, 1
      %p154 = por %p152, %p153
      %p155 = scmp.ne.s32.totalorder %s146, %s147
      %p156 = scmp.eq.s32.totalorder %s31, 0
      %p157 = por %p155, %p156
      %p158 = scmp.ne.s32.totalorder %s146, %s147
      %p159 = scmp.eq.s32.totalorder %s32, 1
      %p160 = por %p158, %p159
      %p162 = scmp.ne.s32.totalorder %s147, %s161
      %p163 = scmp.eq.s32.totalorder %s32, 0
      %p164 = por %p162, %p163
      %s166 = sadd.s32 %s165, 1
      %p169 = scmp.eq.s32.totalorder %s26, 1
      %p170 = scmp.ne.s32.totalorder %s165, %s167
      %p171 = scmp.eq.s32.totalorder %s26, 0
      %p172 = por %p170, %p171
      %p173 = scmp.ne.s32.totalorder %s165, %s167
      %p174 = scmp.eq.s32.totalorder %s31, 1
      %p175 = por %p173, %p174
      %p176 = scmp.ne.s32.totalorder %s167, %s168
      %p177 = scmp.eq.s32.totalorder %s31, 0
      %p178 = por %p176, %p177
      %p179 = scmp.ne.s32.totalorder %s167, %s168
      %p180 = scmp.eq.s32.totalorder %s32, 1
      %p181 = por %p179, %p180
      %p183 = scmp.ne.s32.totalorder %s168, %s182
      %p184 = scmp.eq.s32.totalorder %s32, 0
      %p185 = por %p183, %p184
      %s187 = sadd.s32 %s186, 1
      %p190 = scmp.eq.s32.totalorder %s26, 1
      %p191 = scmp.ne.s32.totalorder %s186, %s188
      %p192 = scmp.eq.s32.totalorder %s26, 0
      %p193 = por %p191, %p192
      %p194 = scmp.ne.s32.totalorder %s186, %s188
      %p195 = scmp.eq.s32.totalorder %s31, 1
      %p196 = por %p194, %p195
      %p197 = scmp.ne.s32.totalorder %s188, %s189
      %p198 = scmp.eq.s32.totalorder %s31, 0
      %p199 = por %p197, %p198
      %p200 = scmp.ne.s32.totalorder %s188, %s189
      %p201 = scmp.eq.s32.totalorder %s32, 1
      %p202 = por %p200, %p201
      %p204 = scmp.ne.s32.totalorder %s189, %s203
      %p205 = scmp.eq.s32.totalorder %s32, 0
      %p206 = por %p204, %p205
      %s207 = ssub.s32 %s26, %s33
      %p208 = scmp.eq.s32.totalorder %s207, 0
      %s210 = sadd.s32 %s209, 1
      %s211 = scalar_select %p208, %s209, %s210
      %p214 = pneg %p208
      %p215 = scmp.eq.s32.totalorder %s26, 1
      %p216 = por %p214, %p215
      %p217 = scmp.ne.s32.totalorder %s209, %s212
      %p218 = scmp.eq.s32.totalorder %s26, 0
      %p219 = por %p217, %p218
      %p220 = scmp.ne.s32.totalorder %s209, %s212
      %p221 = scmp.eq.s32.totalorder %s31, 1
      %p222 = por %p220, %p221
      %p223 = scmp.ne.s32.totalorder %s212, %s213
      %p224 = scmp.eq.s32.totalorder %s31, 0
      %p225 = por %p223, %p224
      %p226 = scmp.ne.s32.totalorder %s212, %s213
      %p227 = scmp.eq.s32.totalorder %s32, 1
      %p228 = por %p226, %p227
      %p230 = scmp.ne.s32.totalorder %s213, %s229
      %p231 = scmp.eq.s32.totalorder %s32, 0
      %p232 = por %p230, %p231
      %p233 = scmp.le.s32.totalorder 1, %s26
      %p234 = scmp.lt.s32.totalorder %s26, 3
      %p235 = pnand %p233, %p234
      %p236 = pneg %p235
      // Predicated region
      $region9: #{tpu_custom_call.1} parent=5 // pred_check
        _
      $region10: #{tpu_custom_call.1} parent=5 // pred_check_branch
        %238 = sbr.rel (%p235) target = $region12
      $region11: #{tpu_custom_call.1} parent=5 // pred_region
        %s239 = ssub.s32 %s26, 1
        // Predicated region
        $region13: #{tpu_custom_call.1} parent=11 // pred_check
          %p240 = pneg %p73
        $region14: #{tpu_custom_call.1} parent=11 // pred_check_branch
          %242 = sbr.rel (%p240) target = $region16
        $region15: #{tpu_custom_call.1} parent=11 // pred_region
          _
        $region16: #{tpu_custom_call.1} parent=11 // pred_fallthru
          _
        // Predicated region
        $region17: #{tpu_custom_call.1} parent=11 // pred_check
          %p243 = pneg %p94
        $region18: #{tpu_custom_call.1} parent=11 // pred_check_branch
          %245 = sbr.rel (%p243) target = $region20
        $region19: #{tpu_custom_call.1} parent=11 // pred_region
          _
        $region20: #{tpu_custom_call.1} parent=11 // pred_fallthru
          _
        // Predicated region
        $region21: #{tpu_custom_call.1} parent=11 // pred_check
          %p246 = pneg %p115
        $region22: #{tpu_custom_call.1} parent=11 // pred_check_branch
          %248 = sbr.rel (%p246) target = $region24
        $region23: #{tpu_custom_call.1} parent=11 // pred_region
          %s250 = ssub.s32 4096, 4096
          %251 = vsyncadd [#allocation8], %s250
          %s252 = sshll.u32 [#allocation7], 4
          %s253 = int_to_ptr.vmem [resolvable:$true] %s252
          %258 = dma.hbm_to_vmem [thread:$0]  %s3, 4096, %s253, [#allocation8], 256, 256, 16
        $region24: #{tpu_custom_call.1} parent=11 // pred_fallthru
          _
        // Predicated region
        $region25: #{tpu_custom_call.1} parent=11 // pred_check
          %p259 = pneg %p136
        $region26: #{tpu_custom_call.1} parent=11 // pred_check_branch
          %261 = sbr.rel (%p259) target = $region28
        $region27: #{tpu_custom_call.1} parent=11 // pred_region
          %s263 = ssub.s32 4096, 4096
          %264 = vsyncadd [#allocation8], %s263
          %s265 = sshll.u32 [#allocation9], 4
          %s266 = int_to_ptr.vmem [resolvable:$true] %s265
          %271 = dma.hbm_to_vmem [thread:$0]  %s4, 4096, %s266, [#allocation8], 256, 256, 16
        $region28: #{tpu_custom_call.1} parent=11 // pred_fallthru
          _
        // Predicated region
        $region29: #{tpu_custom_call.1} parent=11 // pred_check
          %p272 = pneg %p157
        $region30: #{tpu_custom_call.1} parent=11 // pred_check_branch
          %274 = sbr.rel (%p272) target = $region32
        $region31: #{tpu_custom_call.1} parent=11 // pred_region
          %s276 = ssub.s32 4096, 4096
          %277 = vsyncadd [#allocation11], %s276
          %s278 = sshll.u32 [#allocation10], 4
          %s279 = int_to_ptr.vmem [resolvable:$true] %s278
          %284 = dma.hbm_to_vmem [thread:$0]  %s5, 4096, %s279, [#allocation11], 64, 64, 4
        $region32: #{tpu_custom_call.1} parent=11 // pred_fallthru
          _
        // Predicated region
        $region33: #{tpu_custom_call.1} parent=11 // pred_check
          %p285 = pneg %p178
        $region34: #{tpu_custom_call.1} parent=11 // pred_check_branch
          %287 = sbr.rel (%p285) target = $region36
        $region35: #{tpu_custom_call.1} parent=11 // pred_region
          _
        $region36: #{tpu_custom_call.1} parent=11 // pred_fallthru
          _
        // Predicated region
        $region37: #{tpu_custom_call.1} parent=11 // pred_check
          %p288 = pneg %p199
        $region38: #{tpu_custom_call.1} parent=11 // pred_check_branch
          %290 = sbr.rel (%p288) target = $region40
        $region39: #{tpu_custom_call.1} parent=11 // pred_region
          _
        $region40: #{tpu_custom_call.1} parent=11 // pred_fallthru
          _
      $region12: #{tpu_custom_call.1} parent=5 // pred_fallthru
        _
      %p291 = scmp.lt.s32.totalorder %s26, 2
      // Predicated region
      $region41: #{tpu_custom_call.1} parent=5 // pred_check
        %p292 = pneg %p291
      $region42: #{tpu_custom_call.1} parent=5 // pred_check_branch
        %294 = sbr.rel (%p292) target = $region44
      $region43: #{tpu_custom_call.1} parent=5 // pred_region
        // Predicated region
        $region45: #{tpu_custom_call.1} parent=43 // pred_check
          %p295 = pneg %p46
        $region46: #{tpu_custom_call.1} parent=43 // pred_check_branch
          %297 = sbr.rel (%p295) target = $region48
        $region47: #{tpu_custom_call.1} parent=43 // pred_region
          %s298 = sand.u32 %s36, 1
          %s299 = scalar_lea.sflag [#allocation5], %s298
          %s300 = sand.u32 %s36, 1
          %s301 = smul.addr %s300, 8
          %s302 = scalar_lea.vmem [#allocation4], %s301
          %s304 = ssub.s32 128, 128
          %305 = vsyncadd %s299, %s304
          %s306 = smul.addr %s26, 128
          %s307 = scalar_lea.hbm %s0, %s306
          %s309 = sshll.u32 %s302, 4
          %s310 = int_to_ptr.vmem [resolvable:$true] %s309
          %312 = dma.hbm_to_vmem [thread:$0]  %s307, 128, %s310, %s299
        $region48: #{tpu_custom_call.1} parent=43 // pred_fallthru
          _
      $region44: #{tpu_custom_call.1} parent=5 // pred_fallthru
        _
      %p313 = scmp.le.s32.totalorder 1, %s26
      %p314 = scmp.lt.s32.totalorder %s26, 3
      %p315 = pnand %p313, %p314
      %p316 = pneg %p315
      // Predicated region
      $region49: #{tpu_custom_call.1} parent=5 // pred_check
        _
      $region50: #{tpu_custom_call.1} parent=5 // pred_check_branch
        %318 = sbr.rel (%p315) target = $region52
      $region51: #{tpu_custom_call.1} parent=5 // pred_region
        %s319 = ssub.s32 %s26, 1
        %s320 = sand.u32 %s39, 1
        %s321 = scalar_lea.sflag [#allocation5], %s320
        %s322 = sand.u32 %s39, 1
        %s323 = smul.addr %s322, 8
        %s324 = scalar_lea.vmem [#allocation4], %s323
        // Predicated region
        $region53: #{tpu_custom_call.1} parent=51 // pred_check
          %p325 = pneg %p52
        $region54: #{tpu_custom_call.1} parent=51 // pred_check_branch
          %327 = sbr.rel (%p325) target = $region56
        $region55: #{tpu_custom_call.1} parent=51 // pred_region
          %328 = dma.done %s321, 128
        $region56: #{tpu_custom_call.1} parent=51 // pred_fallthru
          _
        // Predicated region
        $region57: #{tpu_custom_call.1} parent=51 // pred_check
          %p329 = pneg %p115
        $region58: #{tpu_custom_call.1} parent=51 // pred_check_branch
          %331 = sbr.rel (%p329) target = $region60
        $region59: #{tpu_custom_call.1} parent=51 // pred_region
          %332 = dma.done [#allocation8], 4096
        $region60: #{tpu_custom_call.1} parent=51 // pred_fallthru
          _
        // Predicated region
        $region61: #{tpu_custom_call.1} parent=51 // pred_check
          %p333 = pneg %p136
        $region62: #{tpu_custom_call.1} parent=51 // pred_check_branch
          %335 = sbr.rel (%p333) target = $region64
        $region63: #{tpu_custom_call.1} parent=51 // pred_region
          %336 = dma.done [#allocation8], 4096
        $region64: #{tpu_custom_call.1} parent=51 // pred_fallthru
          _
        // Predicated region
        $region65: #{tpu_custom_call.1} parent=51 // pred_check
          %p337 = pneg %p157
        $region66: #{tpu_custom_call.1} parent=51 // pred_check_branch
          %339 = sbr.rel (%p337) target = $region68
        $region67: #{tpu_custom_call.1} parent=51 // pred_region
          %340 = dma.done [#allocation11], 4096
        $region68: #{tpu_custom_call.1} parent=51 // pred_fallthru
          _
        %s341 = sand.u32 %s39, 1
        %s342 = scalar_lea.sflag [#allocation5], %s341
        %s343 = sand.u32 %s39, 1
        %s344 = smul.addr %s343, 8
        %s345 = scalar_lea.vmem [#allocation4], %s344
        %p346 = pneg %p52
        %p347 = pneg %p49
        %p348 = pneg %p73
        %p349 = pneg %p70
        %p350 = pneg %p94
        %p351 = pneg %p91
        %p352 = pneg %p115
        %p353 = pneg %p112
        %p354 = pneg %p136
        %p355 = pneg %p133
        %p356 = pneg %p157
        %p357 = pneg %p154
        %p358 = pneg %p178
        %p359 = pneg %p175
        %p360 = pneg %p199
        %p361 = pneg %p196
        %p362 = pneg %p225
        %p363 = pneg %p222
        %s364 = sand.u32 %s212, 1
        %s365 = scalar_lea.sflag [#allocation6], %s364
        %s366 = sand.u32 %s212, 1
        %s367 = smul.addr %s366, 8
        %s368 = scalar_lea.vmem [#allocation12], %s367
        %v370 = vld [vmem:[%s324] sm:$0xff]
        %v371 = vld [vmem:[%s1] sm:$0x1]
        %v372 = vmul.f32 %v370, %v370
        %373 = vadd.xlane.f32.xlu0 %v372
        %v374 = vpop.xlane.xlu0 %373
        %v375 = vrcp.pop 128.0
        %v376 = vmul.f32 %v374, %v375
        %v377 = vadd.f32 %v376, 1e-08
        %v378 = vrsqrt.pop %v377
        %v379 = vmul.f32 %v370, %v378
        %v381 = vlaneseq
        %v382 = vshrl.u32 %v381, 7
        %v383 = vsub.s32 0, %v382
        %v384 = vrot.slane %v371, %v383
        %v386 = vmul.f32 %v379, %v384
        %v387 = vand.u32 2147483647, %v386
        %388 = vmax.xlane.f32.xlu0 %v387
        %v389 = vpop.xlane.xlu0 %388
        %v390 = vmax.f32 %v389, 1e-05
        %v391 = vrcp.pop %v390
        %v392 = vmul.f32 127.0, %v391
        %v393 = vmul.f32 %v386, %v392
        %v394 = vround.ne.pseudo %v393
        %v395 = vmax.f32 %v394, -128.0
        %v396 = vmin.f32 %v395, 127.0
        %v397 = vmul.f32 %v390, 0.007874016
        %v398 = vld [vmem:[#allocation7] sm:$0xff]
        %v399 = vld [vmem:[#allocation7 + $0x8] sm:$0xff]
        %v400 = vld [vmem:[#allocation7 + $0x10] sm:$0xff]
        %v401 = vld [vmem:[#allocation7 + $0x18] sm:$0xff]
        %v402 = vld [vmem:[#allocation7 + $0x20] sm:$0xff]
        %v403 = vld [vmem:[#allocation7 + $0x28] sm:$0xff]
        %v404 = vld [vmem:[#allocation7 + $0x30] sm:$0xff]
        %v405 = vld [vmem:[#allocation7 + $0x38] sm:$0xff]
        %v406 = vld [vmem:[#allocation7 + $0x40] sm:$0xff]
        %v407 = vld [vmem:[#allocation7 + $0x48] sm:$0xff]
        %v408 = vld [vmem:[#allocation7 + $0x50] sm:$0xff]
        %v409 = vld [vmem:[#allocation7 + $0x58] sm:$0xff]
        %v410 = vld [vmem:[#allocation7 + $0x60] sm:$0xff]
        %v411 = vld [vmem:[#allocation7 + $0x68] sm:$0xff]
        %v412 = vld [vmem:[#allocation7 + $0x70] sm:$0xff]
        %v413 = vld [vmem:[#allocation7 + $0x78] sm:$0xff]
        %v414 = vld [vmem:[#allocation7 + $0x80] sm:$0xff]
        %v415 = vld [vmem:[#allocation7 + $0x88] sm:$0xff]
        %v416 = vld [vmem:[#allocation7 + $0x90] sm:$0xff]
        %v417 = vld [vmem:[#allocation7 + $0x98] sm:$0xff]
        %v418 = vld [vmem:[#allocation7 + $0xa0] sm:$0xff]
        %v419 = vld [vmem:[#allocation7 + $0xa8] sm:$0xff]
        %v420 = vld [vmem:[#allocation7 + $0xb0] sm:$0xff]
        %v421 = vld [vmem:[#allocation7 + $0xb8] sm:$0xff]
        %v422 = vld [vmem:[#allocation7 + $0xc0] sm:$0xff]
        %v423 = vld [vmem:[#allocation7 + $0xc8] sm:$0xff]
        %v424 = vld [vmem:[#allocation7 + $0xd0] sm:$0xff]
        %v425 = vld [vmem:[#allocation7 + $0xd8] sm:$0xff]
        %v426 = vld [vmem:[#allocation7 + $0xe0] sm:$0xff]
        %v427 = vld [vmem:[#allocation7 + $0xe8] sm:$0xff]
        %v428 = vld [vmem:[#allocation7 + $0xf0] sm:$0xff]
        %v429 = vld [vmem:[#allocation7 + $0xf8] sm:$0xff]
        %v430 = vpack.c.bf16 %v396, %v396
        %v463 = vunpack.c.l.b16 %v398
        %v464 = vunpack.c.h.b16 %v398
        %v465 = vunpack.c.l.b16 %v399
        %v466 = vunpack.c.h.b16 %v399
        %v467 = vunpack.c.l.b16 %v400
        %v468 = vunpack.c.h.b16 %v400
        %v469 = vunpack.c.l.b16 %v401
        %v470 = vunpack.c.h.b16 %v401
        %v471 = vunpack.c.l.b16 %v402
        %v472 = vunpack.c.h.b16 %v402
        %v473 = vunpack.c.l.b16 %v403
        %v474 = vunpack.c.h.b16 %v403
        %v475 = vunpack.c.l.b16 %v404
        %v476 = vunpack.c.h.b16 %v404
        %v477 = vunpack.c.l.b16 %v405
        %v478 = vunpack.c.h.b16 %v405
        %v479 = vunpack.c.l.b16 %v406
        %v480 = vunpack.c.h.b16 %v406
        %v481 = vunpack.c.l.b16 %v407
        %v482 = vunpack.c.h.b16 %v407
        %v483 = vunpack.c.l.b16 %v408
        %v484 = vunpack.c.h.b16 %v408
        %v485 = vunpack.c.l.b16 %v409
        %v486 = vunpack.c.h.b16 %v409
        %v487 = vunpack.c.l.b16 %v410
        %v488 = vunpack.c.h.b16 %v410
        %v489 = vunpack.c.l.b16 %v411
        %v490 = vunpack.c.h.b16 %v411
        %v491 = vunpack.c.l.b16 %v412
        %v492 = vunpack.c.h.b16 %v412
        %v493 = vunpack.c.l.b16 %v413
        %v494 = vunpack.c.h.b16 %v413
        %v495 = vunpack.c.l.b16 %v414
        %v496 = vunpack.c.h.b16 %v414
        %v497 = vunpack.c.l.b16 %v415
        %v498 = vunpack.c.h.b16 %v415
        %v499 = vunpack.c.l.b16 %v416
        %v500 = vunpack.c.h.b16 %v416
        %v501 = vunpack.c.l.b16 %v417
        %v502 = vunpack.c.h.b16 %v417
        %v503 = vunpack.c.l.b16 %v418
        %v504 = vunpack.c.h.b16 %v418
        %v505 = vunpack.c.l.b16 %v419
        %v506 = vunpack.c.h.b16 %v419
        %v507 = vunpack.c.l.b16 %v420
        %v508 = vunpack.c.h.b16 %v420
        %v509 = vunpack.c.l.b16 %v421
        %v510 = vunpack.c.h.b16 %v421
        %v511 = vunpack.c.l.b16 %v422
        %v512 = vunpack.c.h.b16 %v422
        %v513 = vunpack.c.l.b16 %v423
        %v514 = vunpack.c.h.b16 %v423
        %v515 = vunpack.c.l.b16 %v424
        %v516 = vunpack.c.h.b16 %v424
        %v517 = vunpack.c.l.b16 %v425
        %v518 = vunpack.c.h.b16 %v425
        %v519 = vunpack.c.l.b16 %v426
        %v520 = vunpack.c.h.b16 %v426
        %v521 = vunpack.c.l.b16 %v427
        %v522 = vunpack.c.h.b16 %v427
        %v523 = vunpack.c.l.b16 %v428
        %v524 = vunpack.c.h.b16 %v428
        %v525 = vunpack.c.l.b16 %v429
        %v526 = vunpack.c.h.b16 %v429
        %v527 = vpack.c.b16 %v467, %v463
        %v528 = vpack.c.b16 %v468, %v464
        %v529 = vpack.c.b16 %v469, %v465
        %v530 = vpack.c.b16 %v470, %v466
        %v531 = vpack.c.b16 %v475, %v471
        %v532 = vpack.c.b16 %v476, %v472
        %v533 = vpack.c.b16 %v477, %v473
        %v534 = vpack.c.b16 %v478, %v474
        %v535 = vpack.c.b16 %v483, %v479
        %v536 = vpack.c.b16 %v484, %v480
        %v537 = vpack.c.b16 %v485, %v481
        %v538 = vpack.c.b16 %v486, %v482
        %v539 = vpack.c.b16 %v491, %v487
        %v540 = vpack.c.b16 %v492, %v488
        %v541 = vpack.c.b16 %v493, %v489
        %v542 = vpack.c.b16 %v494, %v490
        %v543 = vpack.c.b16 %v499, %v495
        %v544 = vpack.c.b16 %v500, %v496
        %v545 = vpack.c.b16 %v501, %v497
        %v546 = vpack.c.b16 %v502, %v498
        %v547 = vpack.c.b16 %v507, %v503
        %v548 = vpack.c.b16 %v508, %v504
        %v549 = vpack.c.b16 %v509, %v505
        %v550 = vpack.c.b16 %v510, %v506
        %v551 = vpack.c.b16 %v515, %v511
        %v552 = vpack.c.b16 %v516, %v512
        %v553 = vpack.c.b16 %v517, %v513
        %v554 = vpack.c.b16 %v518, %v514
        %v555 = vpack.c.b16 %v523, %v519
        %v556 = vpack.c.b16 %v524, %v520
        %v557 = vpack.c.b16 %v525, %v521
        %v558 = vpack.c.b16 %v526, %v522
        %591 = vmatprep.subr.bf16.mxu0 %v556
        %592 = vmatpush1.bf16.msra.mxu0 %v555
        %593 = vmatprep.subr.bf16.mxu0 %v552
        %594 = vmatpush1.bf16.msra.mxu0 %v551
        %595 = vmatprep.subr.bf16.mxu0 %v548
        %596 = vmatpush1.bf16.msra.mxu0 %v547
        %597 = vmatprep.subr.bf16.mxu0 %v544
        %598 = vmatpush1.bf16.msra.mxu0 %v543
        %599 = vmatprep.subr.bf16.mxu0 %v540
        %600 = vmatpush1.bf16.msra.mxu0 %v539
        %601 = vmatprep.subr.bf16.mxu0 %v536
        %602 = vmatpush1.bf16.msra.mxu0 %v535
        %603 = vmatprep.subr.bf16.mxu0 %v532
        %604 = vmatpush1.bf16.msra.mxu0 %v531
        %605 = vmatprep.subr.bf16.mxu0 %v528
        %606 = vmatpush1.bf16.msra.mxu0 %v527
        %607 = vmatprep.subr.bf16.mxu0 0
        %608 = vmatpush2.bf16.msra.mxu0 0
        %609 = vmatprep.subr.bf16.mxu0 0
        %610 = vmatpush2.bf16.msra.mxu0 0
        %611 = vmatprep.subr.bf16.mxu0 0
        %612 = vmatpush2.bf16.msra.mxu0 0
        %613 = vmatprep.subr.bf16.mxu0 0
        %614 = vmatpush2.bf16.msra.mxu0 0
        %615 = vmatprep.subr.bf16.mxu0 0
        %616 = vmatpush2.bf16.msra.mxu0 0
        %617 = vmatprep.subr.bf16.mxu0 0
        %618 = vmatpush2.bf16.msra.mxu0 0
        %619 = vmatprep.subr.bf16.mxu0 0
        %620 = vmatpush2.bf16.msra.mxu0 0
        %621 = vmatprep.subr.bf16.mxu0 0
        %622 = vmatpush2.bf16.msra.mxu0 0
        %623 = vmatprep.mubr.bf16.mxu0 0
        %624 = vmatmul.mubr.bf16.gmra.mxu0 %v430
        %v625 = vpop.f32.mrf.mxu0
        %v626 = vadd.f32 0.0, %v625
        %v627 = vpop.f32.mrf.mxu0
        %v628 = vadd.f32 0.0, %v627
        %v629 = vpop.f32.mrf.mxu0
        %v630 = vpop.f32.mrf.mxu0
        %631 = vdwg.mxu0
        %632 = vmatprep.subr.bf16.mxu0 %v558
        %633 = vmatpush1.bf16.msra.mxu0 %v557
        %634 = vmatprep.subr.bf16.mxu0 %v554
        %635 = vmatpush1.bf16.msra.mxu0 %v553
        %636 = vmatprep.subr.bf16.mxu0 %v550
        %637 = vmatpush1.bf16.msra.mxu0 %v549
        %638 = vmatprep.subr.bf16.mxu0 %v546
        %639 = vmatpush1.bf16.msra.mxu0 %v545
        %640 = vmatprep.subr.bf16.mxu0 %v542
        %641 = vmatpush1.bf16.msra.mxu0 %v541
        %642 = vmatprep.subr.bf16.mxu0 %v538
        %643 = vmatpush1.bf16.msra.mxu0 %v537
        %644 = vmatprep.subr.bf16.mxu0 %v534
        %645 = vmatpush1.bf16.msra.mxu0 %v533
        %646 = vmatprep.subr.bf16.mxu0 %v530
        %647 = vmatpush1.bf16.msra.mxu0 %v529
        %648 = vmatprep.subr.bf16.mxu0 0
        %649 = vmatpush2.bf16.msra.mxu0 0
        %650 = vmatprep.subr.bf16.mxu0 0
        %651 = vmatpush2.bf16.msra.mxu0 0
        %652 = vmatprep.subr.bf16.mxu0 0
        %653 = vmatpush2.bf16.msra.mxu0 0
        %654 = vmatprep.subr.bf16.mxu0 0
        %655 = vmatpush2.bf16.msra.mxu0 0
        %656 = vmatprep.subr.bf16.mxu0 0
        %657 = vmatpush2.bf16.msra.mxu0 0
        %658 = vmatprep.subr.bf16.mxu0 0
        %659 = vmatpush2.bf16.msra.mxu0 0
        %660 = vmatprep.subr.bf16.mxu0 0
        %661 = vmatpush2.bf16.msra.mxu0 0
        %662 = vmatprep.subr.bf16.mxu0 0
        %663 = vmatpush2.bf16.msra.mxu0 0
        %664 = vmatprep.mubr.bf16.mxu0 0
        %665 = vmatmul.mubr.bf16.gmra.mxu0 %v430
        %v666 = vpop.f32.mrf.mxu0
        %v667 = vadd.f32 0.0, %v666
        %v668 = vpop.f32.mrf.mxu0
        %v669 = vadd.f32 0.0, %v668
        %v670 = vpop.f32.mrf.mxu0
        %v671 = vpop.f32.mrf.mxu0
        %672 = vdwg.mxu0
        %v673 = vld [vmem:[#allocation2] sm:$0x1]
        %v675 = vlaneseq
        %v676 = vshrl.u32 %v675, 7
        %v677 = vsub.s32 0, %v676
        %v678 = vrot.slane %v673, %v677
        %v680 = vmul.f32 %v397, %v678
        %682 = vset.pattern.permute.xlu0 0
        %683 = vperm.xlu0 %682, %v680
        %v684 = vpop.permute.xlu0 %683
        %v686 = vmul.f32 %v626, %v684
        %v687 = vmul.f32 %v628, %v684
        %v688 = vmul.f32 %v667, %v684
        %v689 = vmul.f32 %v669, %v684
        %v690 = vld [vmem:[#allocation9] sm:$0xff]
        %v691 = vld [vmem:[#allocation9 + $0x8] sm:$0xff]
        %v692 = vld [vmem:[#allocation9 + $0x10] sm:$0xff]
        %v693 = vld [vmem:[#allocation9 + $0x18] sm:$0xff]
        %v694 = vld [vmem:[#allocation9 + $0x20] sm:$0xff]
        %v695 = vld [vmem:[#allocation9 + $0x28] sm:$0xff]
        %v696 = vld [vmem:[#allocation9 + $0x30] sm:$0xff]
        %v697 = vld [vmem:[#allocation9 + $0x38] sm:$0xff]
        %v698 = vld [vmem:[#allocation9 + $0x40] sm:$0xff]
        %v699 = vld [vmem:[#allocation9 + $0x48] sm:$0xff]
        %v700 = vld [vmem:[#allocation9 + $0x50] sm:$0xff]
        %v701 = vld [vmem:[#allocation9 + $0x58] sm:$0xff]
        %v702 = vld [vmem:[#allocation9 + $0x60] sm:$0xff]
        %v703 = vld [vmem:[#allocation9 + $0x68] sm:$0xff]
        %v704 = vld [vmem:[#allocation9 + $0x70] sm:$0xff]
        %v705 = vld [vmem:[#allocation9 + $0x78] sm:$0xff]
        %v706 = vld [vmem:[#allocation9 + $0x80] sm:$0xff]
        %v707 = vld [vmem:[#allocation9 + $0x88] sm:$0xff]
        %v708 = vld [vmem:[#allocation9 + $0x90] sm:$0xff]
        %v709 = vld [vmem:[#allocation9 + $0x98] sm:$0xff]
        %v710 = vld [vmem:[#allocation9 + $0xa0] sm:$0xff]
        %v711 = vld [vmem:[#allocation9 + $0xa8] sm:$0xff]
        %v712 = vld [vmem:[#allocation9 + $0xb0] sm:$0xff]
        %v713 = vld [vmem:[#allocation9 + $0xb8] sm:$0xff]
        %v714 = vld [vmem:[#allocation9 + $0xc0] sm:$0xff]
        %v715 = vld [vmem:[#allocation9 + $0xc8] sm:$0xff]
        %v716 = vld [vmem:[#allocation9 + $0xd0] sm:$0xff]
        %v717 = vld [vmem:[#allocation9 + $0xd8] sm:$0xff]
        %v718 = vld [vmem:[#allocation9 + $0xe0] sm:$0xff]
        %v719 = vld [vmem:[#allocation9 + $0xe8] sm:$0xff]
        %v720 = vld [vmem:[#allocation9 + $0xf0] sm:$0xff]
        %v721 = vld [vmem:[#allocation9 + $0xf8] sm:$0xff]
        %v754 = vunpack.c.l.b16 %v690
        %v755 = vunpack.c.h.b16 %v690
        %v756 = vunpack.c.l.b16 %v691
        %v757 = vunpack.c.h.b16 %v691
        %v758 = vunpack.c.l.b16 %v692
        %v759 = vunpack.c.h.b16 %v692
        %v760 = vunpack.c.l.b16 %v693
        %v761 = vunpack.c.h.b16 %v693
        %v762 = vunpack.c.l.b16 %v694
        %v763 = vunpack.c.h.b16 %v694
        %v764 = vunpack.c.l.b16 %v695
        %v765 = vunpack.c.h.b16 %v695
        %v766 = vunpack.c.l.b16 %v696
        %v767 = vunpack.c.h.b16 %v696
        %v768 = vunpack.c.l.b16 %v697
        %v769 = vunpack.c.h.b16 %v697
        %v770 = vunpack.c.l.b16 %v698
        %v771 = vunpack.c.h.b16 %v698
        %v772 = vunpack.c.l.b16 %v699
        %v773 = vunpack.c.h.b16 %v699
        %v774 = vunpack.c.l.b16 %v700
        %v775 = vunpack.c.h.b16 %v700
        %v776 = vunpack.c.l.b16 %v701
        %v777 = vunpack.c.h.b16 %v701
        %v778 = vunpack.c.l.b16 %v702
        %v779 = vunpack.c.h.b16 %v702
        %v780 = vunpack.c.l.b16 %v703
        %v781 = vunpack.c.h.b16 %v703
        %v782 = vunpack.c.l.b16 %v704
        %v783 = vunpack.c.h.b16 %v704
        %v784 = vunpack.c.l.b16 %v705
        %v785 = vunpack.c.h.b16 %v705
        %v786 = vunpack.c.l.b16 %v706
        %v787 = vunpack.c.h.b16 %v706
        %v788 = vunpack.c.l.b16 %v707
        %v789 = vunpack.c.h.b16 %v707
        %v790 = vunpack.c.l.b16 %v708
        %v791 = vunpack.c.h.b16 %v708
        %v792 = vunpack.c.l.b16 %v709
        %v793 = vunpack.c.h.b16 %v709
        %v794 = vunpack.c.l.b16 %v710
        %v795 = vunpack.c.h.b16 %v710
        %v796 = vunpack.c.l.b16 %v711
        %v797 = vunpack.c.h.b16 %v711
        %v798 = vunpack.c.l.b16 %v712
        %v799 = vunpack.c.h.b16 %v712
        %v800 = vunpack.c.l.b16 %v713
        %v801 = vunpack.c.h.b16 %v713
        %v802 = vunpack.c.l.b16 %v714
        %v803 = vunpack.c.h.b16 %v714
        %v804 = vunpack.c.l.b16 %v715
        %v805 = vunpack.c.h.b16 %v715
        %v806 = vunpack.c.l.b16 %v716
        %v807 = vunpack.c.h.b16 %v716
        %v808 = vunpack.c.l.b16 %v717
        %v809 = vunpack.c.h.b16 %v717
        %v810 = vunpack.c.l.b16 %v718
        %v811 = vunpack.c.h.b16 %v718
        %v812 = vunpack.c.l.b16 %v719
        %v813 = vunpack.c.h.b16 %v719
        %v814 = vunpack.c.l.b16 %v720
        %v815 = vunpack.c.h.b16 %v720
        %v816 = vunpack.c.l.b16 %v721
        %v817 = vunpack.c.h.b16 %v721
        %v818 = vpack.c.b16 %v758, %v754
        %v819 = vpack.c.b16 %v759, %v755
        %v820 = vpack.c.b16 %v760, %v756
        %v821 = vpack.c.b16 %v761, %v757
        %v822 = vpack.c.b16 %v766, %v762
        %v823 = vpack.c.b16 %v767, %v763
        %v824 = vpack.c.b16 %v768, %v764
        %v825 = vpack.c.b16 %v769, %v765
        %v826 = vpack.c.b16 %v774, %v770
        %v827 = vpack.c.b16 %v775, %v771
        %v828 = vpack.c.b16 %v776, %v772
        %v829 = vpack.c.b16 %v777, %v773
        %v830 = vpack.c.b16 %v782, %v778
        %v831 = vpack.c.b16 %v783, %v779
        %v832 = vpack.c.b16 %v784, %v780
        %v833 = vpack.c.b16 %v785, %v781
        %v834 = vpack.c.b16 %v790, %v786
        %v835 = vpack.c.b16 %v791, %v787
        %v836 = vpack.c.b16 %v792, %v788
        %v837 = vpack.c.b16 %v793, %v789
        %v838 = vpack.c.b16 %v798, %v794
        %v839 = vpack.c.b16 %v799, %v795
        %v840 = vpack.c.b16 %v800, %v796
        %v841 = vpack.c.b16 %v801, %v797
        %v842 = vpack.c.b16 %v806, %v802
        %v843 = vpack.c.b16 %v807, %v803
        %v844 = vpack.c.b16 %v808, %v804
        %v845 = vpack.c.b16 %v809, %v805
        %v846 = vpack.c.b16 %v814, %v810
        %v847 = vpack.c.b16 %v815, %v811
        %v848 = vpack.c.b16 %v816, %v812
        %v849 = vpack.c.b16 %v817, %v813
        %882 = vmatprep.subr.bf16.mxu0 %v847
        %883 = vmatpush1.bf16.msra.mxu0 %v846
        %884 = vmatprep.subr.bf16.mxu0 %v843
        %885 = vmatpush1.bf16.msra.mxu0 %v842
        %886 = vmatprep.subr.bf16.mxu0 %v839
        %887 = vmatpush1.bf16.msra.mxu0 %v838
        %888 = vmatprep.subr.bf16.mxu0 %v835
        %889 = vmatpush1.bf16.msra.mxu0 %v834
        %890 = vmatprep.subr.bf16.mxu0 %v831
        %891 = vmatpush1.bf16.msra.mxu0 %v830
        %892 = vmatprep.subr.bf16.mxu0 %v827
        %893 = vmatpush1.bf16.msra.mxu0 %v826
        %894 = vmatprep.subr.bf16.mxu0 %v823
        %895 = vmatpush1.bf16.msra.mxu0 %v822
        %896 = vmatprep.subr.bf16.mxu0 %v819
        %897 = vmatpush1.bf16.msra.mxu0 %v818
        %898 = vmatprep.subr.bf16.mxu0 0
        %899 = vmatpush2.bf16.msra.mxu0 0
        %900 = vmatprep.subr.bf16.mxu0 0
        %901 = vmatpush2.bf16.msra.mxu0 0
        %902 = vmatprep.subr.bf16.mxu0 0
        %903 = vmatpush2.bf16.msra.mxu0 0
        %904 = vmatprep.subr.bf16.mxu0 0
        %905 = vmatpush2.bf16.msra.mxu0 0
        %906 = vmatprep.subr.bf16.mxu0 0
        %907 = vmatpush2.bf16.msra.mxu0 0
        %908 = vmatprep.subr.bf16.mxu0 0
        %909 = vmatpush2.bf16.msra.mxu0 0
        %910 = vmatprep.subr.bf16.mxu0 0
        %911 = vmatpush2.bf16.msra.mxu0 0
        %912 = vmatprep.subr.bf16.mxu0 0
        %913 = vmatpush2.bf16.msra.mxu0 0
        %914 = vmatprep.mubr.bf16.mxu0 0
        %915 = vmatmul.mubr.bf16.gmra.mxu0 %v430
        %v916 = vpop.f32.mrf.mxu0
        %v917 = vadd.f32 0.0, %v916
        %v918 = vpop.f32.mrf.mxu0
        %v919 = vadd.f32 0.0, %v918
        %v920 = vpop.f32.mrf.mxu0
        %v921 = vpop.f32.mrf.mxu0
        %922 = vdwg.mxu0
        %923 = vmatprep.subr.bf16.mxu0 %v849
        %924 = vmatpush1.bf16.msra.mxu0 %v848
        %925 = vmatprep.subr.bf16.mxu0 %v845
        %926 = vmatpush1.bf16.msra.mxu0 %v844
        %927 = vmatprep.subr.bf16.mxu0 %v841
        %928 = vmatpush1.bf16.msra.mxu0 %v840
        %929 = vmatprep.subr.bf16.mxu0 %v837
        %930 = vmatpush1.bf16.msra.mxu0 %v836
        %931 = vmatprep.subr.bf16.mxu0 %v833
        %932 = vmatpush1.bf16.msra.mxu0 %v832
        %933 = vmatprep.subr.bf16.mxu0 %v829
        %934 = vmatpush1.bf16.msra.mxu0 %v828
        %935 = vmatprep.subr.bf16.mxu0 %v825
        %936 = vmatpush1.bf16.msra.mxu0 %v824
        %937 = vmatprep.subr.bf16.mxu0 %v821
        %938 = vmatpush1.bf16.msra.mxu0 %v820
        %939 = vmatprep.subr.bf16.mxu0 0
        %940 = vmatpush2.bf16.msra.mxu0 0
        %941 = vmatprep.subr.bf16.mxu0 0
        %942 = vmatpush2.bf16.msra.mxu0 0
        %943 = vmatprep.subr.bf16.mxu0 0
        %944 = vmatpush2.bf16.msra.mxu0 0
        %945 = vmatprep.subr.bf16.mxu0 0
        %946 = vmatpush2.bf16.msra.mxu0 0
        %947 = vmatprep.subr.bf16.mxu0 0
        %948 = vmatpush2.bf16.msra.mxu0 0
        %949 = vmatprep.subr.bf16.mxu0 0
        %950 = vmatpush2.bf16.msra.mxu0 0
        %951 = vmatprep.subr.bf16.mxu0 0
        %952 = vmatpush2.bf16.msra.mxu0 0
        %953 = vmatprep.subr.bf16.mxu0 0
        %954 = vmatpush2.bf16.msra.mxu0 0
        %955 = vmatprep.mubr.bf16.mxu0 0
        %956 = vmatmul.mubr.bf16.gmra.mxu0 %v430
        %v957 = vpop.f32.mrf.mxu0
        %v958 = vadd.f32 0.0, %v957
        %v959 = vpop.f32.mrf.mxu0
        %v960 = vadd.f32 0.0, %v959
        %v961 = vpop.f32.mrf.mxu0
        %v962 = vpop.f32.mrf.mxu0
        %963 = vdwg.mxu0
        %v964 = vxor.u32 %v686, 2147483648
        %v965 = vxor.u32 %v687, 2147483648
        %v966 = vxor.u32 %v688, 2147483648
        %v967 = vxor.u32 %v689, 2147483648
        %v968 = vmul.f32 %v964, 1.442695
        %v969 = vpow.pop %v968
        %v970 = vmul.f32 %v965, 1.442695
        %v971 = vpow.pop %v970
        %v972 = vmul.f32 %v966, 1.442695
        %v973 = vpow.pop %v972
        %v974 = vmul.f32 %v967, 1.442695
        %v975 = vpow.pop %v974
        %v976 = vadd.f32 %v969, 1.0
        %v977 = vadd.f32 %v971, 1.0
        %v978 = vadd.f32 %v973, 1.0
        %v979 = vadd.f32 %v975, 1.0
        %v980 = vrcp.pop %v976
        %v981 = vmul.f32 1.0, %v980
        %v982 = vrcp.pop %v977
        %v983 = vmul.f32 1.0, %v982
        %v984 = vrcp.pop %v978
        %v985 = vmul.f32 1.0, %v984
        %v986 = vrcp.pop %v979
        %v987 = vmul.f32 1.0, %v986
        %v988 = vmul.f32 %v686, %v981
        %v989 = vmul.f32 %v687, %v983
        %v990 = vmul.f32 %v688, %v985
        %v991 = vmul.f32 %v689, %v987
        %v992 = vmul.f32 %v988, %v917
        %v993 = vmul.f32 %v989, %v919
        %v994 = vmul.f32 %v990, %v958
        %v995 = vmul.f32 %v991, %v960
        %v996 = vld [vmem:[%s2] sm:$0xf]
        %v997 = vmul.f32 %v992, %v992
        %v998 = vmul.f32 %v993, %v993
        %v999 = vmul.f32 %v994, %v994
        %v1000 = vmul.f32 %v995, %v995
        %v1001 = vadd.f32 %v997, %v998
        %v1002 = vadd.f32 %v1001, %v999
        %v1003 = vadd.f32 %v1002, %v1000
        %1004 = vadd.xlane.f32.xlu0 %v1003
        %v1005 = vpop.xlane.xlu0 %1004
        %v1006 = vrcp.pop 512.0
        %v1007 = vmul.f32 %v1005, %v1006
        %v1008 = vadd.f32 %v1007, 1e-08
        %v1009 = vrsqrt.pop %v1008
        %v1010 = vmul.f32 %v992, %v1009
        %v1011 = vmul.f32 %v993, %v1009
        %v1012 = vmul.f32 %v994, %v1009
        %v1013 = vmul.f32 %v995, %v1009
        %v1015 = vlaneseq
        %v1016 = vshrl.u32 %v1015, 7
        %v1017 = vsub.s32 0, %v1016
        %v1018 = vrot.slane %v996, %v1017
        %v1019 = vlaneseq
        %v1020 = vshrl.u32 %v1019, 7
        %v1021 = vsub.s32 1, %v1020
        %v1022 = vrot.slane %v996, %v1021
        %v1023 = vlaneseq
        %v1024 = vshrl.u32 %v1023, 7
        %v1025 = vsub.s32 2, %v1024
        %v1026 = vrot.slane %v996, %v1025
        %v1027 = vlaneseq
        %v1028 = vshrl.u32 %v1027, 7
        %v1029 = vsub.s32 3, %v1028
        %v1030 = vrot.slane %v996, %v1029
        %v1035 = vmul.f32 %v1010, %v1018
        %v1036 = vmul.f32 %v1011, %v1022
        %v1037 = vmul.f32 %v1012, %v1026
        %v1038 = vmul.f32 %v1013, %v1030
        %v1039 = vand.u32 2147483647, %v1035
        %v1040 = vand.u32 2147483647, %v1036
        %v1041 = vand.u32 2147483647, %v1037
        %v1042 = vand.u32 2147483647, %v1038
        %v1043 = vmax.f32 %v1039, %v1040
        %v1044 = vmax.f32 %v1041, %v1042
        %v1045 = vmax.f32 %v1043, %v1044
        %1046 = vmax.xlane.f32.xlu0 %v1045
        %v1047 = vpop.xlane.xlu0 %1046
        %v1048 = vmax.f32 %v1047, 1e-05
        %v1049 = vrcp.pop %v1048
        %v1050 = vmul.f32 127.0, %v1049
        %v1051 = vmul.f32 %v1035, %v1050
        %v1052 = vmul.f32 %v1036, %v1050
        %v1053 = vmul.f32 %v1037, %v1050
        %v1054 = vmul.f32 %v1038, %v1050
        %v1055 = vround.ne.pseudo %v1051
        %v1056 = vround.ne.pseudo %v1052
        %v1057 = vround.ne.pseudo %v1053
        %v1058 = vround.ne.pseudo %v1054
        %v1059 = vmax.f32 %v1055, -128.0
        %v1060 = vmax.f32 %v1056, -128.0
        %v1061 = vmax.f32 %v1057, -128.0
        %v1062 = vmax.f32 %v1058, -128.0
        %v1063 = vmin.f32 %v1059, 127.0
        %v1064 = vmin.f32 %v1060, 127.0
        %v1065 = vmin.f32 %v1061, 127.0
        %v1066 = vmin.f32 %v1062, 127.0
        %v1067 = vmul.f32 %v1048, 0.007874016
        %v1068 = vld [vmem:[#allocation10] sm:$0xf]
        %v1069 = vld [vmem:[#allocation10 + $0x4] sm:$0xf]
        %v1070 = vld [vmem:[#allocation10 + $0x8] sm:$0xf]
        %v1071 = vld [vmem:[#allocation10 + $0xc] sm:$0xf]
        %v1072 = vld [vmem:[#allocation10 + $0x10] sm:$0xf]
        %v1073 = vld [vmem:[#allocation10 + $0x14] sm:$0xf]
        %v1074 = vld [vmem:[#allocation10 + $0x18] sm:$0xf]
        %v1075 = vld [vmem:[#allocation10 + $0x1c] sm:$0xf]
        %v1076 = vld [vmem:[#allocation10 + $0x20] sm:$0xf]
        %v1077 = vld [vmem:[#allocation10 + $0x24] sm:$0xf]
        %v1078 = vld [vmem:[#allocation10 + $0x28] sm:$0xf]
        %v1079 = vld [vmem:[#allocation10 + $0x2c] sm:$0xf]
        %v1080 = vld [vmem:[#allocation10 + $0x30] sm:$0xf]
        %v1081 = vld [vmem:[#allocation10 + $0x34] sm:$0xf]
        %v1082 = vld [vmem:[#allocation10 + $0x38] sm:$0xf]
        %v1083 = vld [vmem:[#allocation10 + $0x3c] sm:$0xf]
        %v1084 = vld [vmem:[#allocation10 + $0x40] sm:$0xf]
        %v1085 = vld [vmem:[#allocation10 + $0x44] sm:$0xf]
        %v1086 = vld [vmem:[#allocation10 + $0x48] sm:$0xf]
        %v1087 = vld [vmem:[#allocation10 + $0x4c] sm:$0xf]
        %v1088 = vld [vmem:[#allocation10 + $0x50] sm:$0xf]
        %v1089 = vld [vmem:[#allocation10 + $0x54] sm:$0xf]
        %v1090 = vld [vmem:[#allocation10 + $0x58] sm:$0xf]
        %v1091 = vld [vmem:[#allocation10 + $0x5c] sm:$0xf]
        %v1092 = vld [vmem:[#allocation10 + $0x60] sm:$0xf]
        %v1093 = vld [vmem:[#allocation10 + $0x64] sm:$0xf]
        %v1094 = vld [vmem:[#allocation10 + $0x68] sm:$0xf]
        %v1095 = vld [vmem:[#allocation10 + $0x6c] sm:$0xf]
        %v1096 = vld [vmem:[#allocation10 + $0x70] sm:$0xf]
        %v1097 = vld [vmem:[#allocation10 + $0x74] sm:$0xf]
        %v1098 = vld [vmem:[#allocation10 + $0x78] sm:$0xf]
        %v1099 = vld [vmem:[#allocation10 + $0x7c] sm:$0xf]
        %v1100 = vld [vmem:[#allocation10 + $0x80] sm:$0xf]
        %v1101 = vld [vmem:[#allocation10 + $0x84] sm:$0xf]
        %v1102 = vld [vmem:[#allocation10 + $0x88] sm:$0xf]
        %v1103 = vld [vmem:[#allocation10 + $0x8c] sm:$0xf]
        %v1104 = vld [vmem:[#allocation10 + $0x90] sm:$0xf]
        %v1105 = vld [vmem:[#allocation10 + $0x94] sm:$0xf]
        %v1106 = vld [vmem:[#allocation10 + $0x98] sm:$0xf]
        %v1107 = vld [vmem:[#allocation10 + $0x9c] sm:$0xf]
        %v1108 = vld [vmem:[#allocation10 + $0xa0] sm:$0xf]
        %v1109 = vld [vmem:[#allocation10 + $0xa4] sm:$0xf]
        %v1110 = vld [vmem:[#allocation10 + $0xa8] sm:$0xf]
        %v1111 = vld [vmem:[#allocation10 + $0xac] sm:$0xf]
        %v1112 = vld [vmem:[#allocation10 + $0xb0] sm:$0xf]
        %v1113 = vld [vmem:[#allocation10 + $0xb4] sm:$0xf]
        %v1114 = vld [vmem:[#allocation10 + $0xb8] sm:$0xf]
        %v1115 = vld [vmem:[#allocation10 + $0xbc] sm:$0xf]
        %v1116 = vld [vmem:[#allocation10 + $0xc0] sm:$0xf]
        %v1117 = vld [vmem:[#allocation10 + $0xc4] sm:$0xf]
        %v1118 = vld [vmem:[#allocation10 + $0xc8] sm:$0xf]
        %v1119 = vld [vmem:[#allocation10 + $0xcc] sm:$0xf]
        %v1120 = vld [vmem:[#allocation10 + $0xd0] sm:$0xf]
        %v1121 = vld [vmem:[#allocation10 + $0xd4] sm:$0xf]
        %v1122 = vld [vmem:[#allocation10 + $0xd8] sm:$0xf]
        %v1123 = vld [vmem:[#allocation10 + $0xdc] sm:$0xf]
        %v1124 = vld [vmem:[#allocation10 + $0xe0] sm:$0xf]
        %v1125 = vld [vmem:[#allocation10 + $0xe4] sm:$0xf]
        %v1126 = vld [vmem:[#allocation10 + $0xe8] sm:$0xf]
        %v1127 = vld [vmem:[#allocation10 + $0xec] sm:$0xf]
        %v1128 = vld [vmem:[#allocation10 + $0xf0] sm:$0xf]
        %v1129 = vld [vmem:[#allocation10 + $0xf4] sm:$0xf]
        %v1130 = vld [vmem:[#allocation10 + $0xf8] sm:$0xf]
        %v1131 = vld [vmem:[#allocation10 + $0xfc] sm:$0xf]
        %v1132 = vpack.c.bf16 %v1063, %v1063
        %v1133 = vpack.c.bf16 %v1064, %v1064
        %v1134 = vpack.c.bf16 %v1065, %v1065
        %v1135 = vpack.c.bf16 %v1066, %v1066
        %v1200 = vunpack.c.l.b16 %v1068
        %v1201 = vunpack.c.l.b16 %v1069
        %v1202 = vunpack.c.l.b16 %v1070
        %v1203 = vunpack.c.l.b16 %v1071
        %v1204 = vunpack.c.l.b16 %v1072
        %v1205 = vunpack.c.l.b16 %v1073
        %v1206 = vunpack.c.l.b16 %v1074
        %v1207 = vunpack.c.l.b16 %v1075
        %v1208 = vunpack.c.l.b16 %v1076
        %v1209 = vunpack.c.l.b16 %v1077
        %v1210 = vunpack.c.l.b16 %v1078
        %v1211 = vunpack.c.l.b16 %v1079
        %v1212 = vunpack.c.l.b16 %v1080
        %v1213 = vunpack.c.l.b16 %v1081
        %v1214 = vunpack.c.l.b16 %v1082
        %v1215 = vunpack.c.l.b16 %v1083
        %v1216 = vunpack.c.l.b16 %v1084
        %v1217 = vunpack.c.l.b16 %v1085
        %v1218 = vunpack.c.l.b16 %v1086
        %v1219 = vunpack.c.l.b16 %v1087
        %v1220 = vunpack.c.l.b16 %v1088
        %v1221 = vunpack.c.l.b16 %v1089
        %v1222 = vunpack.c.l.b16 %v1090
        %v1223 = vunpack.c.l.b16 %v1091
        %v1224 = vunpack.c.l.b16 %v1092
        %v1225 = vunpack.c.l.b16 %v1093
        %v1226 = vunpack.c.l.b16 %v1094
        %v1227 = vunpack.c.l.b16 %v1095
        %v1228 = vunpack.c.l.b16 %v1096
        %v1229 = vunpack.c.l.b16 %v1097
        %v1230 = vunpack.c.l.b16 %v1098
        %v1231 = vunpack.c.l.b16 %v1099
        %v1232 = vunpack.c.l.b16 %v1100
        %v1233 = vunpack.c.l.b16 %v1101
        %v1234 = vunpack.c.l.b16 %v1102
        %v1235 = vunpack.c.l.b16 %v1103
        %v1236 = vunpack.c.l.b16 %v1104
        %v1237 = vunpack.c.l.b16 %v1105
        %v1238 = vunpack.c.l.b16 %v1106
        %v1239 = vunpack.c.l.b16 %v1107
        %v1240 = vunpack.c.l.b16 %v1108
        %v1241 = vunpack.c.l.b16 %v1109
        %v1242 = vunpack.c.l.b16 %v1110
        %v1243 = vunpack.c.l.b16 %v1111
        %v1244 = vunpack.c.l.b16 %v1112
        %v1245 = vunpack.c.l.b16 %v1113
        %v1246 = vunpack.c.l.b16 %v1114
        %v1247 = vunpack.c.l.b16 %v1115
        %v1248 = vunpack.c.l.b16 %v1116
        %v1249 = vunpack.c.l.b16 %v1117
        %v1250 = vunpack.c.l.b16 %v1118
        %v1251 = vunpack.c.l.b16 %v1119
        %v1252 = vunpack.c.l.b16 %v1120
        %v1253 = vunpack.c.l.b16 %v1121
        %v1254 = vunpack.c.l.b16 %v1122
        %v1255 = vunpack.c.l.b16 %v1123
        %v1256 = vunpack.c.l.b16 %v1124
        %v1257 = vunpack.c.l.b16 %v1125
        %v1258 = vunpack.c.l.b16 %v1126
        %v1259 = vunpack.c.l.b16 %v1127
        %v1260 = vunpack.c.l.b16 %v1128
        %v1261 = vunpack.c.l.b16 %v1129
        %v1262 = vunpack.c.l.b16 %v1130
        %v1263 = vunpack.c.l.b16 %v1131
        %v1264 = vpack.c.b16 %v1201, %v1200
        %v1265 = vpack.c.b16 %v1203, %v1202
        %v1266 = vpack.c.b16 %v1205, %v1204
        %v1267 = vpack.c.b16 %v1207, %v1206
        %v1268 = vpack.c.b16 %v1209, %v1208
        %v1269 = vpack.c.b16 %v1211, %v1210
        %v1270 = vpack.c.b16 %v1213, %v1212
        %v1271 = vpack.c.b16 %v1215, %v1214
        %v1272 = vpack.c.b16 %v1217, %v1216
        %v1273 = vpack.c.b16 %v1219, %v1218
        %v1274 = vpack.c.b16 %v1221, %v1220
        %v1275 = vpack.c.b16 %v1223, %v1222
        %v1276 = vpack.c.b16 %v1225, %v1224
        %v1277 = vpack.c.b16 %v1227, %v1226
        %v1278 = vpack.c.b16 %v1229, %v1228
        %v1279 = vpack.c.b16 %v1231, %v1230
        %v1280 = vpack.c.b16 %v1233, %v1232
        %v1281 = vpack.c.b16 %v1235, %v1234
        %v1282 = vpack.c.b16 %v1237, %v1236
        %v1283 = vpack.c.b16 %v1239, %v1238
        %v1284 = vpack.c.b16 %v1241, %v1240
        %v1285 = vpack.c.b16 %v1243, %v1242
        %v1286 = vpack.c.b16 %v1245, %v1244
        %v1287 = vpack.c.b16 %v1247, %v1246
        %v1288 = vpack.c.b16 %v1249, %v1248
        %v1289 = vpack.c.b16 %v1251, %v1250
        %v1290 = vpack.c.b16 %v1253, %v1252
        %v1291 = vpack.c.b16 %v1255, %v1254
        %v1292 = vpack.c.b16 %v1257, %v1256
        %v1293 = vpack.c.b16 %v1259, %v1258
        %v1294 = vpack.c.b16 %v1261, %v1260
        %v1295 = vpack.c.b16 %v1263, %v1262
        %1328 = vmatprep.subr.bf16.mxu0 0
        %1329 = vmatpush1.bf16.msra.mxu0 %v1271
        %1330 = vmatprep.subr.bf16.mxu0 0
        %1331 = vmatpush1.bf16.msra.mxu0 %v1270
        %1332 = vmatprep.subr.bf16.mxu0 0
        %1333 = vmatpush1.bf16.msra.mxu0 %v1269
        %1334 = vmatprep.subr.bf16.mxu0 0
        %1335 = vmatpush1.bf16.msra.mxu0 %v1268
        %1336 = vmatprep.subr.bf16.mxu0 0
        %1337 = vmatpush1.bf16.msra.mxu0 %v1267
        %1338 = vmatprep.subr.bf16.mxu0 0
        %1339 = vmatpush1.bf16.msra.mxu0 %v1266
        %1340 = vmatprep.subr.bf16.mxu0 0
        %1341 = vmatpush1.bf16.msra.mxu0 %v1265
        %1342 = vmatprep.subr.bf16.mxu0 0
        %1343 = vmatpush1.bf16.msra.mxu0 %v1264
        %1344 = vmatprep.subr.bf16.mxu0 0
        %1345 = vmatpush2.bf16.msra.mxu0 %v1279
        %1346 = vmatprep.subr.bf16.mxu0 0
        %1347 = vmatpush2.bf16.msra.mxu0 %v1278
        %1348 = vmatprep.subr.bf16.mxu0 0
        %1349 = vmatpush2.bf16.msra.mxu0 %v1277
        %1350 = vmatprep.subr.bf16.mxu0 0
        %1351 = vmatpush2.bf16.msra.mxu0 %v1276
        %1352 = vmatprep.subr.bf16.mxu0 0
        %1353 = vmatpush2.bf16.msra.mxu0 %v1275
        %1354 = vmatprep.subr.bf16.mxu0 0
        %1355 = vmatpush2.bf16.msra.mxu0 %v1274
        %1356 = vmatprep.subr.bf16.mxu0 0
        %1357 = vmatpush2.bf16.msra.mxu0 %v1273
        %1358 = vmatprep.subr.bf16.mxu0 0
        %1359 = vmatpush2.bf16.msra.mxu0 %v1272
        %1360 = vmatprep.mubr.bf16.mxu0 %v1133
        %1361 = vmatmul.mubr.bf16.gmra.mxu0 %v1132
        %v1362 = vpop.f32.mrf.mxu0
        %v1363 = vadd.f32 0.0, %v1362
        %v1364 = vpop.f32.mrf.mxu0
        %v1365 = vpop.f32.mrf.mxu0
        %v1366 = vpop.f32.mrf.mxu0
        %1367 = vdwg.mxu0
        %1368 = vmatprep.subr.bf16.mxu0 0
        %1369 = vmatpush1.bf16.msra.mxu0 %v1287
        %1370 = vmatprep.subr.bf16.mxu0 0
        %1371 = vmatpush1.bf16.msra.mxu0 %v1286
        %1372 = vmatprep.subr.bf16.mxu0 0
        %1373 = vmatpush1.bf16.msra.mxu0 %v1285
        %1374 = vmatprep.subr.bf16.mxu0 0
        %1375 = vmatpush1.bf16.msra.mxu0 %v1284
        %1376 = vmatprep.subr.bf16.mxu0 0
        %1377 = vmatpush1.bf16.msra.mxu0 %v1283
        %1378 = vmatprep.subr.bf16.mxu0 0
        %1379 = vmatpush1.bf16.msra.mxu0 %v1282
        %1380 = vmatprep.subr.bf16.mxu0 0
        %1381 = vmatpush1.bf16.msra.mxu0 %v1281
        %1382 = vmatprep.subr.bf16.mxu0 0
        %1383 = vmatpush1.bf16.msra.mxu0 %v1280
        %1384 = vmatprep.subr.bf16.mxu0 0
        %1385 = vmatpush2.bf16.msra.mxu0 %v1295
        %1386 = vmatprep.subr.bf16.mxu0 0
        %1387 = vmatpush2.bf16.msra.mxu0 %v1294
        %1388 = vmatprep.subr.bf16.mxu0 0
        %1389 = vmatpush2.bf16.msra.mxu0 %v1293
        %1390 = vmatprep.subr.bf16.mxu0 0
        %1391 = vmatpush2.bf16.msra.mxu0 %v1292
        %1392 = vmatprep.subr.bf16.mxu0 0
        %1393 = vmatpush2.bf16.msra.mxu0 %v1291
        %1394 = vmatprep.subr.bf16.mxu0 0
        %1395 = vmatpush2.bf16.msra.mxu0 %v1290
        %1396 = vmatprep.subr.bf16.mxu0 0
        %1397 = vmatpush2.bf16.msra.mxu0 %v1289
        %1398 = vmatprep.subr.bf16.mxu0 0
        %1399 = vmatpush2.bf16.msra.mxu0 %v1288
        %1400 = vmatprep.mubr.bf16.mxu0 %v1135
        %1401 = vmatmul.mubr.bf16.gmra.mxu0 %v1134
        %v1402 = vpop.f32.mrf.mxu0
        %v1403 = vadd.f32 %v1363, %v1402
        %v1404 = vpop.f32.mrf.mxu0
        %v1405 = vpop.f32.mrf.mxu0
        %v1406 = vpop.f32.mrf.mxu0
        %1407 = vdwg.mxu0
        %v1408 = vld [vmem:[#allocation3] sm:$0x1]
        %v1410 = vlaneseq
        %v1411 = vshrl.u32 %v1410, 7
        %v1412 = vsub.s32 0, %v1411
        %v1413 = vrot.slane %v1408, %v1412
        %v1415 = vmul.f32 %v1067, %v1413
        %1417 = vset.pattern.permute.xlu0 0
        %1418 = vperm.xlu0 %1417, %v1415
        %v1419 = vpop.permute.xlu0 %1418
        %v1421 = vmul.f32 %v1403, %v1419
        %1422 = vst [vmem:[%s368] sm:$0xff] %v1421
        %s1423 = sand.u32 %s212, 1
        %s1424 = scalar_lea.sflag [#allocation6], %s1423
        %s1425 = sand.u32 %s212, 1
        %s1426 = smul.addr %s1425, 8
        %s1427 = scalar_lea.vmem [#allocation12], %s1426
        // Predicated region
        $region69: #{tpu_custom_call.1} parent=51 // pred_check
          %p1428 = pneg %p222
        $region70: #{tpu_custom_call.1} parent=51 // pred_check_branch
          %1430 = sbr.rel (%p1428) target = $region72
        $region71: #{tpu_custom_call.1} parent=51 // pred_region
          %s1432 = ssub.s32 128, 128
          %1433 = vsyncadd %s1424, %s1432
          %s1434 = smul.addr %s31, 128
          %s1435 = scalar_lea.hbm %s8, %s1434
          %s1437 = sshll.u32 %s1427, 4
          %s1438 = int_to_ptr.vmem [resolvable:$true] %s1437
          %1440 = dma.vmem_to_hbm [thread:$0]  %s1438, 128, %s1435, %s1424
        $region72: #{tpu_custom_call.1} parent=51 // pred_fallthru
          _
      $region52: #{tpu_custom_call.1} parent=5 // pred_fallthru
        _
      %p1441 = scmp.le.s32.totalorder 2, %s26
      // Predicated region
      $region73: #{tpu_custom_call.1} parent=5 // pred_check
        %p1442 = pneg %p1441
      $region74: #{tpu_custom_call.1} parent=5 // pred_check_branch
        %1444 = sbr.rel (%p1442) target = $region76
      $region75: #{tpu_custom_call.1} parent=5 // pred_region
        %s1445 = ssub.s32 %s26, 2
        // Predicated region
        $region77: #{tpu_custom_call.1} parent=75 // pred_check
          %p1446 = pneg %p228
        $region78: #{tpu_custom_call.1} parent=75 // pred_check_branch
          %1448 = sbr.rel (%p1446) target = $region80
        $region79: #{tpu_custom_call.1} parent=75 // pred_region
          %s1449 = sand.u32 %s213, 1
          %s1450 = scalar_lea.sflag [#allocation6], %s1449
          %s1451 = sand.u32 %s213, 1
          %s1452 = smul.addr %s1451, 8
          %s1453 = scalar_lea.vmem [#allocation12], %s1452
          %1454 = dma.done %s1450, 128
        $region80: #{tpu_custom_call.1} parent=75 // pred_fallthru
          _
      $region76: #{tpu_custom_call.1} parent=5 // pred_fallthru
        _
    $region6: #{tpu_custom_call.1} parent=1 // loop_footer
      %s30 = sadd.s32 1, %s26
    $region7: #{tpu_custom_call.1} parent=1 // loop_footer_branch
      %25 = sbr.rel target = $region3
    $region8: #{tpu_custom_call.1} parent=1 // loop_exit
      _
    %1455 = vsyncpa [#allocation5], 1
    %s1456 = scalar_lea.sflag [#allocation5], 1
    %1457 = vsyncpa %s1456, 1
    %1458 = vsyncpa [#allocation8], 1
    %1459 = vsyncpa [#allocation11], 1
    %1460 = vsyncpa [#allocation6], 1
    %s1461 = scalar_lea.sflag [#allocation6], 1
    %1462 = vsyncpa %s1461, 1

</llo_original>
